<compile_context>
chip_gen: v7x
topology: tpu7x:2x2x1
jax: 0.10.0
libtpu: 0.0.40
codegen_flags: <defaults>
</compile_context>

<pallas_src>
import functools

import jax
import jax.numpy as jnp
from jax import lax
from jax.experimental import pallas as pl
from jax.experimental.pallas import tpu as pltpu

EPS = 1e-5
NUM_GROUPS = 8


def _round_up(x, m):
    return (x + m - 1) // m * m


def _basic_conv2d_kernel(x_ref, w_ref, gamma_ref, beta_ref, valid_ref, o_ref, *,
                         tap_offsets, stride, q, cpg, norm_count, with_relu):
    # x_ref:     (B_t, C_in, L)   bf16 zero-padded, spatially-flattened input samples
    # w_ref:     (T, C_out, C_in) bf16 per-tap weight matrices (T = KH*KW)
    # gamma_ref: (C_out, 1)       f32 GroupNorm scale
    # beta_ref:  (C_out, 1)       f32 GroupNorm shift
    # valid_ref: (1, Q)           f32 1.0 where the "wide" column is a real output column
    # o_ref:     (B_t, C_out, Q)  f32 channels-major wide output (wrapper drops extra cols)
    b_t, c_out = o_ref.shape[0], o_ref.shape[1]
    num_groups = c_out // cpg

    valid = valid_ref[...]                                          # (1, Q)

    # one-hot channel -> group membership built from iotas (VPU compares only)
    ch = lax.broadcasted_iota(jnp.int32, (c_out, num_groups), 0)
    gid = lax.broadcasted_iota(jnp.int32, (c_out, num_groups), 1)
    lower = gid * cpg
    onehot = jnp.where((ch >= lower) & (ch < lower + cpg), 1.0, 0.0)  # (C_out, G) f32

    inv_count = 1.0 / norm_count

    for b in range(b_t):
        # ---- convolution: accumulate one small MXU matmul per kernel tap ----
        y = jnp.zeros((c_out, q), jnp.float32)
        for t, off in enumerate(tap_offsets):
            if stride == 1:
                xs = x_ref[b, :, pl.ds(off, q)]                      # (C_in, Q) bf16
            else:
                xs = x_ref[b, :, pl.ds(off, q, stride=stride)]
            y = y + jnp.dot(w_ref[t], xs, preferred_element_type=jnp.float32)

        # ---- GroupNorm statistics over valid spatial positions only (f32) ----
        ym = y * valid                                               # mask non-output cols
        ch_sum = jnp.sum(ym, axis=1, keepdims=True)                  # (C_out, 1)
        ch_sq = jnp.sum(ym * y, axis=1, keepdims=True)               # (C_out, 1)
        grp_sum = jnp.sum(ch_sum * onehot, axis=0, keepdims=True)    # (1, G)
        grp_sq = jnp.sum(ch_sq * onehot, axis=0, keepdims=True)      # (1, G)
        mean_g = grp_sum * inv_count
        var_g = jnp.maximum(grp_sq * inv_count - mean_g * mean_g, 0.0)
        inv_g = lax.rsqrt(var_g + EPS)                               # (1, G)
        # broadcast group stats back to per-channel (C_out, 1)
        mean_c = jnp.sum(mean_g * onehot, axis=1, keepdims=True)
        inv_c = jnp.sum(inv_g * onehot, axis=1, keepdims=True)

        scale = inv_c * gamma_ref[...]                               # (C_out, 1)
        shift = beta_ref[...] - mean_c * scale
        out = y * scale + shift
        if with_relu:
            out = jnp.maximum(out, 0.0)
        o_ref[b] = out.astype(o_ref.dtype)


def _pick_batch_tile(n, bytes_per_sample):
    """Largest divisor of n that fits a modest VMEM budget (safe for v7x's 64 MiB) and
    keeps >= 2 grid steps so both v7x TensorCores get work."""
    budget = 8 * 1024 * 1024
    best = 1
    for cand in range(1, n + 1):
        if n % cand:
            continue
        if n >= 2 and n // cand < 2:
            continue
        if cand * bytes_per_sample > budget:
            continue
        best = cand
    return best


def basic_conv2d(x_nchw, weight_oihw, gamma, beta, *,
                 stride=1, padding=0, dilation=1, with_relu=False):
    """Forward of BasicConv2d: (N, C_in, H, W) f32 -> (N, C_out, H_out, W_out) f32."""
    n, c_in, h, w = x_nchw.shape
    c_out, _, kh, kw = weight_oihw.shape
    assert c_out % NUM_GROUPS == 0
    cpg = c_out // NUM_GROUPS

    h_pad, w_pad = h + 2 * padding, w + 2 * padding
    h_out = (h_pad - dilation * (kh - 1) - 1) // stride + 1
    w_out = (w_pad - dilation * (kw - 1) - 1) // stride + 1
    q = h_out * w_pad                     # "wide" spatial extent (wrap columns dropped later)
    q_pad = _round_up(q, 128)             # lane-aligned: unmasked, lane-dense output stores

    tap_offsets = tuple(i * dilation * w_pad + j * dilation
                        for i in range(kh) for j in range(kw))
    l_needed = stride * (q_pad - 1) + max(tap_offsets) + 1
    l = _round_up(max(l_needed, h_pad * w_pad), 128)

    # --- host-side prep: pad + flatten input (single cheap pass, no KH*KW im2col blow-up) ---
    x_pad = jnp.pad(x_nchw, ((0, 0), (0, 0), (padding, padding), (padding, padding)))
    x_flat = x_pad.reshape(n, c_in, h_pad * w_pad)
    x_flat = jnp.pad(x_flat, ((0, 0), (0, 0), (0, l - h_pad * w_pad)))
    x_flat = x_flat.astype(jnp.bfloat16)

    # per-tap weight matrices: (KH*KW, C_out, C_in), bf16 for the MXU
    w_taps = weight_oihw.transpose(2, 3, 0, 1).reshape(kh * kw, c_out, c_in)
    w_taps = w_taps.astype(jnp.bfloat16)

    gamma2 = gamma.reshape(c_out, 1).astype(jnp.float32)
    beta2 = beta.reshape(c_out, 1).astype(jnp.float32)

    # valid-column mask over the wide spatial axis (excludes wrap-around + lane-pad cols)
    idx = jnp.arange(q_pad, dtype=jnp.int32)
    valid = (((idx % w_pad) < w_out) & (idx < q)).astype(jnp.float32).reshape(1, q_pad)

    bytes_per_sample = 2 * (c_in * l * 2) + 2 * (c_out * q_pad * 4)  # dbl-buffered in + out
    b_t = _pick_batch_tile(n, bytes_per_sample)

    kernel = functools.partial(
        _basic_conv2d_kernel,
        tap_offsets=tap_offsets, stride=stride, q=q_pad, cpg=cpg,
        norm_count=float(cpg * h_out * w_out), with_relu=with_relu)

    out_wide = pl.pallas_call(
        kernel,
        out_shape=jax.ShapeDtypeStruct((n, c_out, q_pad), jnp.float32),
        grid_spec=pltpu.PrefetchScalarGridSpec(
            num_scalar_prefetch=0,
            grid=(n // b_t,),
            in_specs=[
                pl.BlockSpec((b_t, c_in, l), lambda b: (b, 0, 0)),
                pl.BlockSpec((kh * kw, c_out, c_in), lambda b: (0, 0, 0)),
                pl.BlockSpec((c_out, 1), lambda b: (0, 0)),
                pl.BlockSpec((c_out, 1), lambda b: (0, 0)),
                pl.BlockSpec((1, q_pad), lambda b: (0, 0)),
            ],
            out_specs=pl.BlockSpec((b_t, c_out, q_pad), lambda b: (b, 0, 0)),
        ),
        compiler_params=pltpu.CompilerParams(dimension_semantics=("parallel",)),
    )(x_flat, w_taps, gamma2, beta2, valid)

    # (N, C_out, Q_pad) -> keep real wide columns -> (N, C_out, H_out, W_pad) -> drop wrap cols.
    return out_wide[..., :q].reshape(n, c_out, h_out, w_pad)[..., :w_out]


def _reference(x, w, gamma, beta, *, stride, padding, dilation, with_relu):
    y = lax.conv_general_dilated(
        x, w, window_strides=(stride, stride),
        padding=[(padding, padding), (padding, padding)],
        rhs_dilation=(dilation, dilation),
        dimension_numbers=("NCHW", "OIHW", "NCHW"))
    n, c, h, ww = y.shape
    yg = y.reshape(n, NUM_GROUPS, c // NUM_GROUPS, h, ww)
    mean = yg.mean(axis=(2, 3, 4), keepdims=True)
    var = yg.var(axis=(2, 3, 4), keepdims=True)
    yn = ((yg - mean) / jnp.sqrt(var + EPS)).reshape(n, c, h, ww)
    out = yn * gamma[None, :, None, None] + beta[None, :, None, None]
    return jnp.maximum(out, 0.0) if with_relu else out


if __name__ == "__main__":
    # Module config: BasicConv2d(in_planes=4, out_planes=32, kernel_size=3,
    #                            stride=1, padding=1, with_relu=True)
    in_planes, out_planes, ksize = 4, 32, 3
    stride, padding, dilation, with_relu = 1, 1, 1, True

    key = jax.random.PRNGKey(0)
    kx, kw, kg, kb = jax.random.split(key, 4)
    x = jax.random.normal(kx, (2, in_planes, 16, 16), dtype=jnp.float32)
    weight = jax.random.normal(kw, (out_planes, in_planes, ksize, ksize),
                               dtype=jnp.float32) * 0.1
    gamma = 1.0 + 0.1 * jax.random.normal(kg, (out_planes,), dtype=jnp.float32)
    beta = 0.1 * jax.random.normal(kb, (out_planes,), dtype=jnp.float32)

    out = basic_conv2d(x, weight, gamma, beta, stride=stride, padding=padding,
                       dilation=dilation, with_relu=with_relu)
    out = jax.block_until_ready(out)

    ref = _reference(x, weight, gamma, beta, stride=stride, padding=padding,
                     dilation=dilation, with_relu=with_relu)
    assert out.shape == ref.shape == (2, out_planes, 16, 16)
    err = float(jnp.max(jnp.abs(out - ref)))
    assert err < 5e-2, err   # bf16 matmul operands, f32 accumulation/GroupNorm

    print("KERNEL_OK")
</pallas_src>

<mosaic_0001>
module attributes {stable_mosaic.version = 11 : i64} {
  func.func @_basic_conv2d_kernel(%arg0: i32, %arg1: memref<1x4x512xbf16, #tpu.memory_space<vmem>>, %arg2: memref<9x32x4xbf16, #tpu.memory_space<vmem>>, %arg3: memref<32x1xf32, #tpu.memory_space<vmem>>, %arg4: memref<32x1xf32, #tpu.memory_space<vmem>>, %arg5: memref<1x384xf32, #tpu.memory_space<vmem>>, %arg6: memref<1x32x384xf32, #tpu.memory_space<vmem>>) attributes {dimension_semantics = [#tpu.dimension_semantics<parallel>], iteration_bounds = array<i64: 2>, scalar_prefetch = 0 : i64, scratch_operands = 0 : i64, tpu.core_type = #tpu.core_type<tc>, window_params = [{transform_indices = @transform_0, window_bounds = array<i64: 1, 4, 512>}, {pipeline_mode = #tpu.pipeline_mode<synchronous>, transform_indices = @transform_1, window_bounds = array<i64: 9, 32, 4>}, {pipeline_mode = #tpu.pipeline_mode<synchronous>, transform_indices = @transform_2, window_bounds = array<i64: 32, 1>}, {pipeline_mode = #tpu.pipeline_mode<synchronous>, transform_indices = @transform_3, window_bounds = array<i64: 32, 1>}, {pipeline_mode = #tpu.pipeline_mode<synchronous>, transform_indices = @transform_4, window_bounds = array<i64: 1, 384>}, {transform_indices = @transform_5, window_bounds = array<i64: 1, 32, 384>}]} {
    %c0 = arith.constant 0 : index
    %c0_0 = arith.constant 0 : index
    %0 = vector.load %arg5[%c0, %c0_0] : memref<1x384xf32, #tpu.memory_space<vmem>>, vector<1x384xf32>
    %1 = tpu.iota {dimensions = array<i32: 0>} : vector<32x8xi32>
    %2 = tpu.iota {dimensions = array<i32: 1>} : vector<32x8xi32>
    %c4_i32 = arith.constant 4 : i32
    %3 = vector.broadcast %c4_i32 : i32 to vector<32x8xi32>
    %4 = arith.muli %2, %3 : vector<32x8xi32>
    %5 = arith.cmpi sge, %1, %4 : vector<32x8xi32>
    %c4_i32_1 = arith.constant 4 : i32
    %6 = vector.broadcast %c4_i32_1 : i32 to vector<32x8xi32>
    %7 = arith.addi %4, %6 : vector<32x8xi32>
    %8 = arith.cmpi slt, %1, %7 : vector<32x8xi32>
    %9 = arith.andi %5, %8 : vector<32x8xi1>
    %cst = arith.constant 1.000000e+00 : f32
    %cst_2 = arith.constant 0.000000e+00 : f32
    %10 = vector.broadcast %cst : f32 to vector<32x8xf32>
    %11 = vector.broadcast %cst_2 : f32 to vector<32x8xf32>
    %12 = arith.select %9, %10, %11 : vector<32x8xi1>, vector<32x8xf32>
    %cst_3 = arith.constant 0.000000e+00 : f32
    %13 = vector.broadcast %cst_3 : f32 to vector<32x384xf32>
    %c0_4 = arith.constant 0 : index
    %c0_5 = arith.constant 0 : index
    %c0_6 = arith.constant 0 : index
    %14 = vector.load %arg1[%c0_4, %c0_5, %c0_6] : memref<1x4x512xbf16, #tpu.memory_space<vmem>>, vector<1x4x384xbf16>
    %15 = vector.shape_cast %14 : vector<1x4x384xbf16> to vector<4x384xbf16>
    %c0_7 = arith.constant 0 : index
    %c0_8 = arith.constant 0 : index
    %c0_9 = arith.constant 0 : index
    %16 = vector.load %arg2[%c0_7, %c0_8, %c0_9] : memref<9x32x4xbf16, #tpu.memory_space<vmem>>, vector<1x32x4xbf16>
    %17 = vector.shape_cast %16 : vector<1x32x4xbf16> to vector<32x4xbf16>
    %cst_10 = arith.constant dense<0.000000e+00> : vector<32x384xf32>
    %18 = tpu.matmul %17, %15, %cst_10 {dimension_numbers = #tpu.dot_dimension_numbers<[1], [0], [0], [1], [0, 0, 1, 1], [], []>} : vector<32x4xbf16>, vector<4x384xbf16>, vector<32x384xf32> -> vector<32x384xf32>
    %19 = arith.addf %13, %18 : vector<32x384xf32>
    %c0_11 = arith.constant 0 : index
    %c0_12 = arith.constant 0 : index
    %c1 = arith.constant 1 : index
    %20 = vector.load %arg1[%c0_11, %c0_12, %c1] : memref<1x4x512xbf16, #tpu.memory_space<vmem>>, vector<1x4x384xbf16>
    %21 = vector.shape_cast %20 : vector<1x4x384xbf16> to vector<4x384xbf16>
    %c1_13 = arith.constant 1 : index
    %c0_14 = arith.constant 0 : index
    %c0_15 = arith.constant 0 : index
    %22 = vector.load %arg2[%c1_13, %c0_14, %c0_15] : memref<9x32x4xbf16, #tpu.memory_space<vmem>>, vector<1x32x4xbf16>
    %23 = vector.shape_cast %22 : vector<1x32x4xbf16> to vector<32x4xbf16>
    %cst_16 = arith.constant dense<0.000000e+00> : vector<32x384xf32>
    %24 = tpu.matmul %23, %21, %cst_16 {dimension_numbers = #tpu.dot_dimension_numbers<[1], [0], [0], [1], [0, 0, 1, 1], [], []>} : vector<32x4xbf16>, vector<4x384xbf16>, vector<32x384xf32> -> vector<32x384xf32>
    %25 = arith.addf %19, %24 : vector<32x384xf32>
    %c0_17 = arith.constant 0 : index
    %c0_18 = arith.constant 0 : index
    %c2 = arith.constant 2 : index
    %26 = vector.load %arg1[%c0_17, %c0_18, %c2] : memref<1x4x512xbf16, #tpu.memory_space<vmem>>, vector<1x4x384xbf16>
    %27 = vector.shape_cast %26 : vector<1x4x384xbf16> to vector<4x384xbf16>
    %c2_19 = arith.constant 2 : index
    %c0_20 = arith.constant 0 : index
    %c0_21 = arith.constant 0 : index
    %28 = vector.load %arg2[%c2_19, %c0_20, %c0_21] : memref<9x32x4xbf16, #tpu.memory_space<vmem>>, vector<1x32x4xbf16>
    %29 = vector.shape_cast %28 : vector<1x32x4xbf16> to vector<32x4xbf16>
    %cst_22 = arith.constant dense<0.000000e+00> : vector<32x384xf32>
    %30 = tpu.matmul %29, %27, %cst_22 {dimension_numbers = #tpu.dot_dimension_numbers<[1], [0], [0], [1], [0, 0, 1, 1], [], []>} : vector<32x4xbf16>, vector<4x384xbf16>, vector<32x384xf32> -> vector<32x384xf32>
    %31 = arith.addf %25, %30 : vector<32x384xf32>
    %c0_23 = arith.constant 0 : index
    %c0_24 = arith.constant 0 : index
    %c18 = arith.constant 18 : index
    %32 = vector.load %arg1[%c0_23, %c0_24, %c18] : memref<1x4x512xbf16, #tpu.memory_space<vmem>>, vector<1x4x384xbf16>
    %33 = vector.shape_cast %32 : vector<1x4x384xbf16> to vector<4x384xbf16>
    %c3 = arith.constant 3 : index
    %c0_25 = arith.constant 0 : index
    %c0_26 = arith.constant 0 : index
    %34 = vector.load %arg2[%c3, %c0_25, %c0_26] : memref<9x32x4xbf16, #tpu.memory_space<vmem>>, vector<1x32x4xbf16>
    %35 = vector.shape_cast %34 : vector<1x32x4xbf16> to vector<32x4xbf16>
    %cst_27 = arith.constant dense<0.000000e+00> : vector<32x384xf32>
    %36 = tpu.matmul %35, %33, %cst_27 {dimension_numbers = #tpu.dot_dimension_numbers<[1], [0], [0], [1], [0, 0, 1, 1], [], []>} : vector<32x4xbf16>, vector<4x384xbf16>, vector<32x384xf32> -> vector<32x384xf32>
    %37 = arith.addf %31, %36 : vector<32x384xf32>
    %c0_28 = arith.constant 0 : index
    %c0_29 = arith.constant 0 : index
    %c19 = arith.constant 19 : index
    %38 = vector.load %arg1[%c0_28, %c0_29, %c19] : memref<1x4x512xbf16, #tpu.memory_space<vmem>>, vector<1x4x384xbf16>
    %39 = vector.shape_cast %38 : vector<1x4x384xbf16> to vector<4x384xbf16>
    %c4 = arith.constant 4 : index
    %c0_30 = arith.constant 0 : index
    %c0_31 = arith.constant 0 : index
    %40 = vector.load %arg2[%c4, %c0_30, %c0_31] : memref<9x32x4xbf16, #tpu.memory_space<vmem>>, vector<1x32x4xbf16>
    %41 = vector.shape_cast %40 : vector<1x32x4xbf16> to vector<32x4xbf16>
    %cst_32 = arith.constant dense<0.000000e+00> : vector<32x384xf32>
    %42 = tpu.matmul %41, %39, %cst_32 {dimension_numbers = #tpu.dot_dimension_numbers<[1], [0], [0], [1], [0, 0, 1, 1], [], []>} : vector<32x4xbf16>, vector<4x384xbf16>, vector<32x384xf32> -> vector<32x384xf32>
    %43 = arith.addf %37, %42 : vector<32x384xf32>
    %c0_33 = arith.constant 0 : index
    %c0_34 = arith.constant 0 : index
    %c20 = arith.constant 20 : index
    %44 = vector.load %arg1[%c0_33, %c0_34, %c20] : memref<1x4x512xbf16, #tpu.memory_space<vmem>>, vector<1x4x384xbf16>
    %45 = vector.shape_cast %44 : vector<1x4x384xbf16> to vector<4x384xbf16>
    %c5 = arith.constant 5 : index
    %c0_35 = arith.constant 0 : index
    %c0_36 = arith.constant 0 : index
    %46 = vector.load %arg2[%c5, %c0_35, %c0_36] : memref<9x32x4xbf16, #tpu.memory_space<vmem>>, vector<1x32x4xbf16>
    %47 = vector.shape_cast %46 : vector<1x32x4xbf16> to vector<32x4xbf16>
    %cst_37 = arith.constant dense<0.000000e+00> : vector<32x384xf32>
    %48 = tpu.matmul %47, %45, %cst_37 {dimension_numbers = #tpu.dot_dimension_numbers<[1], [0], [0], [1], [0, 0, 1, 1], [], []>} : vector<32x4xbf16>, vector<4x384xbf16>, vector<32x384xf32> -> vector<32x384xf32>
    %49 = arith.addf %43, %48 : vector<32x384xf32>
    %c0_38 = arith.constant 0 : index
    %c0_39 = arith.constant 0 : index
    %c36 = arith.constant 36 : index
    %50 = vector.load %arg1[%c0_38, %c0_39, %c36] : memref<1x4x512xbf16, #tpu.memory_space<vmem>>, vector<1x4x384xbf16>
    %51 = vector.shape_cast %50 : vector<1x4x384xbf16> to vector<4x384xbf16>
    %c6 = arith.constant 6 : index
    %c0_40 = arith.constant 0 : index
    %c0_41 = arith.constant 0 : index
    %52 = vector.load %arg2[%c6, %c0_40, %c0_41] : memref<9x32x4xbf16, #tpu.memory_space<vmem>>, vector<1x32x4xbf16>
    %53 = vector.shape_cast %52 : vector<1x32x4xbf16> to vector<32x4xbf16>
    %cst_42 = arith.constant dense<0.000000e+00> : vector<32x384xf32>
    %54 = tpu.matmul %53, %51, %cst_42 {dimension_numbers = #tpu.dot_dimension_numbers<[1], [0], [0], [1], [0, 0, 1, 1], [], []>} : vector<32x4xbf16>, vector<4x384xbf16>, vector<32x384xf32> -> vector<32x384xf32>
    %55 = arith.addf %49, %54 : vector<32x384xf32>
    %c0_43 = arith.constant 0 : index
    %c0_44 = arith.constant 0 : index
    %c37 = arith.constant 37 : index
    %56 = vector.load %arg1[%c0_43, %c0_44, %c37] : memref<1x4x512xbf16, #tpu.memory_space<vmem>>, vector<1x4x384xbf16>
    %57 = vector.shape_cast %56 : vector<1x4x384xbf16> to vector<4x384xbf16>
    %c7 = arith.constant 7 : index
    %c0_45 = arith.constant 0 : index
    %c0_46 = arith.constant 0 : index
    %58 = vector.load %arg2[%c7, %c0_45, %c0_46] : memref<9x32x4xbf16, #tpu.memory_space<vmem>>, vector<1x32x4xbf16>
    %59 = vector.shape_cast %58 : vector<1x32x4xbf16> to vector<32x4xbf16>
    %cst_47 = arith.constant dense<0.000000e+00> : vector<32x384xf32>
    %60 = tpu.matmul %59, %57, %cst_47 {dimension_numbers = #tpu.dot_dimension_numbers<[1], [0], [0], [1], [0, 0, 1, 1], [], []>} : vector<32x4xbf16>, vector<4x384xbf16>, vector<32x384xf32> -> vector<32x384xf32>
    %61 = arith.addf %55, %60 : vector<32x384xf32>
    %c0_48 = arith.constant 0 : index
    %c0_49 = arith.constant 0 : index
    %c38 = arith.constant 38 : index
    %62 = vector.load %arg1[%c0_48, %c0_49, %c38] : memref<1x4x512xbf16, #tpu.memory_space<vmem>>, vector<1x4x384xbf16>
    %63 = vector.shape_cast %62 : vector<1x4x384xbf16> to vector<4x384xbf16>
    %c8 = arith.constant 8 : index
    %c0_50 = arith.constant 0 : index
    %c0_51 = arith.constant 0 : index
    %64 = vector.load %arg2[%c8, %c0_50, %c0_51] : memref<9x32x4xbf16, #tpu.memory_space<vmem>>, vector<1x32x4xbf16>
    %65 = vector.shape_cast %64 : vector<1x32x4xbf16> to vector<32x4xbf16>
    %cst_52 = arith.constant dense<0.000000e+00> : vector<32x384xf32>
    %66 = tpu.matmul %65, %63, %cst_52 {dimension_numbers = #tpu.dot_dimension_numbers<[1], [0], [0], [1], [0, 0, 1, 1], [], []>} : vector<32x4xbf16>, vector<4x384xbf16>, vector<32x384xf32> -> vector<32x384xf32>
    %67 = arith.addf %61, %66 : vector<32x384xf32>
    %68 = vector.broadcast %0 : vector<1x384xf32> to vector<32x384xf32>
    %69 = arith.mulf %67, %68 : vector<32x384xf32>
    %cst_53 = arith.constant dense<0.000000e+00> : vector<32xf32>
    %70 = vector.multi_reduction <add>, %69, %cst_53 [1] : vector<32x384xf32> to vector<32xf32>
    %71 = vector.shape_cast %70 : vector<32xf32> to vector<32x1xf32>
    %72 = arith.mulf %69, %67 : vector<32x384xf32>
    %cst_54 = arith.constant dense<0.000000e+00> : vector<32xf32>
    %73 = vector.multi_reduction <add>, %72, %cst_54 [1] : vector<32x384xf32> to vector<32xf32>
    %74 = vector.shape_cast %73 : vector<32xf32> to vector<32x1xf32>
    %75 = vector.broadcast %71 : vector<32x1xf32> to vector<32x8xf32>
    %76 = arith.mulf %75, %12 : vector<32x8xf32>
    %cst_55 = arith.constant dense<0.000000e+00> : vector<8xf32>
    %77 = vector.multi_reduction <add>, %76, %cst_55 [0] : vector<32x8xf32> to vector<8xf32>
    %78 = vector.shape_cast %77 : vector<8xf32> to vector<1x8xf32>
    %79 = vector.broadcast %74 : vector<32x1xf32> to vector<32x8xf32>
    %80 = arith.mulf %79, %12 : vector<32x8xf32>
    %cst_56 = arith.constant dense<0.000000e+00> : vector<8xf32>
    %81 = vector.multi_reduction <add>, %80, %cst_56 [0] : vector<32x8xf32> to vector<8xf32>
    %82 = vector.shape_cast %81 : vector<8xf32> to vector<1x8xf32>
    %cst_57 = arith.constant 9.765625E-4 : f32
    %83 = vector.broadcast %cst_57 : f32 to vector<1x8xf32>
    %84 = arith.mulf %78, %83 : vector<1x8xf32>
    %cst_58 = arith.constant 9.765625E-4 : f32
    %85 = vector.broadcast %cst_58 : f32 to vector<1x8xf32>
    %86 = arith.mulf %82, %85 : vector<1x8xf32>
    %87 = arith.mulf %84, %84 : vector<1x8xf32>
    %88 = arith.subf %86, %87 : vector<1x8xf32>
    %cst_59 = arith.constant 0.000000e+00 : f32
    %89 = vector.broadcast %cst_59 : f32 to vector<1x8xf32>
    %90 = arith.maximumf %88, %89 : vector<1x8xf32>
    %cst_60 = arith.constant 9.99999974E-6 : f32
    %91 = vector.broadcast %cst_60 : f32 to vector<1x8xf32>
    %92 = arith.addf %90, %91 : vector<1x8xf32>
    %93 = math.rsqrt %92 : vector<1x8xf32>
    %94 = vector.broadcast %84 : vector<1x8xf32> to vector<32x8xf32>
    %95 = arith.mulf %94, %12 : vector<32x8xf32>
    %cst_61 = arith.constant dense<0.000000e+00> : vector<32xf32>
    %96 = vector.multi_reduction <add>, %95, %cst_61 [1] : vector<32x8xf32> to vector<32xf32>
    %97 = vector.shape_cast %96 : vector<32xf32> to vector<32x1xf32>
    %98 = vector.broadcast %93 : vector<1x8xf32> to vector<32x8xf32>
    %99 = arith.mulf %98, %12 : vector<32x8xf32>
    %cst_62 = arith.constant dense<0.000000e+00> : vector<32xf32>
    %100 = vector.multi_reduction <add>, %99, %cst_62 [1] : vector<32x8xf32> to vector<32xf32>
    %101 = vector.shape_cast %100 : vector<32xf32> to vector<32x1xf32>
    %c0_63 = arith.constant 0 : index
    %c0_64 = arith.constant 0 : index
    %102 = vector.load %arg3[%c0_63, %c0_64] : memref<32x1xf32, #tpu.memory_space<vmem>>, vector<32x1xf32>
    %103 = arith.mulf %101, %102 : vector<32x1xf32>
    %c0_65 = arith.constant 0 : index
    %c0_66 = arith.constant 0 : index
    %104 = vector.load %arg4[%c0_65, %c0_66] : memref<32x1xf32, #tpu.memory_space<vmem>>, vector<32x1xf32>
    %105 = arith.mulf %97, %103 : vector<32x1xf32>
    %106 = arith.subf %104, %105 : vector<32x1xf32>
    %107 = vector.broadcast %103 : vector<32x1xf32> to vector<32x384xf32>
    %108 = arith.mulf %67, %107 : vector<32x384xf32>
    %109 = vector.broadcast %106 : vector<32x1xf32> to vector<32x384xf32>
    %110 = arith.addf %108, %109 : vector<32x384xf32>
    %cst_67 = arith.constant 0.000000e+00 : f32
    %111 = vector.broadcast %cst_67 : f32 to vector<32x384xf32>
    %112 = arith.maximumf %110, %111 : vector<32x384xf32>
    %c0_68 = arith.constant 0 : index
    %c0_69 = arith.constant 0 : index
    %c0_70 = arith.constant 0 : index
    %113 = vector.load %arg6[%c0_68, %c0_69, %c0_70] : memref<1x32x384xf32, #tpu.memory_space<vmem>>, vector<1x32x384xf32>
    %114 = vector.shape_cast %113 : vector<1x32x384xf32> to vector<32x384xf32>
    %115 = vector.shape_cast %112 : vector<32x384xf32> to vector<1x32x384xf32>
    tpu.vector_store %arg6[%c0_68, %c0_69, %c0_70], %115 {strides = array<i32>} : memref<1x32x384xf32, #tpu.memory_space<vmem>>, vector<1x32x384xf32>,
    return
  }
  func.func @transform_0(%arg0: i32) -> (i32, i32, i32) {
    %c0_i32 = arith.constant 0 : i32
    %c0_i32_0 = arith.constant 0 : i32
    %c0_i32_1 = arith.constant 0 : i32
    return %arg0, %c0_i32, %c0_i32_0 : i32, i32, i32
  }
  func.func @transform_1(%arg0: i32) -> (i32, i32, i32) {
    %c0_i32 = arith.constant 0 : i32
    %c0_i32_0 = arith.constant 0 : i32
    %c0_i32_1 = arith.constant 0 : i32
    %c0_i32_2 = arith.constant 0 : i32
    return %c0_i32, %c0_i32_0, %c0_i32_1 : i32, i32, i32
  }
  func.func @transform_2(%arg0: i32) -> (i32, i32) {
    %c0_i32 = arith.constant 0 : i32
    %c0_i32_0 = arith.constant 0 : i32
    %c0_i32_1 = arith.constant 0 : i32
    return %c0_i32, %c0_i32_0 : i32, i32
  }
  func.func @transform_3(%arg0: i32) -> (i32, i32) {
    %c0_i32 = arith.constant 0 : i32
    %c0_i32_0 = arith.constant 0 : i32
    %c0_i32_1 = arith.constant 0 : i32
    return %c0_i32, %c0_i32_0 : i32, i32
  }
  func.func @transform_4(%arg0: i32) -> (i32, i32) {
    %c0_i32 = arith.constant 0 : i32
    %c0_i32_0 = arith.constant 0 : i32
    %c0_i32_1 = arith.constant 0 : i32
    return %c0_i32, %c0_i32_0 : i32, i32
  }
  func.func @transform_5(%arg0: i32) -> (i32, i32, i32) {
    %c0_i32 = arith.constant 0 : i32
    %c0_i32_0 = arith.constant 0 : i32
    %c0_i32_1 = arith.constant 0 : i32
    return %arg0, %c0_i32, %c0_i32_0 : i32, i32, i32
  }
}

</mosaic_0001>

<llo_original>
// kernel: tpu_custom_call.1
$region0: #{tpu_custom_call.1}
  #allocation0 [shape = 'u32[]', space=smem, size = 0x4, offset = 0x4, fixed_abs, tag = 'smem constant byte address 0x4 - core index']
  #allocation1 [shape = 'u32[144,128]{1,0:T(1,128)}', space=vmem, size = 0x12000, scoped, tag = 'internal scratch']
  %s0 = inlined_call_operand.vmem [shape: bf16[2,4,512], index: 0, kind: input, shape index: {}]
  %s1 = inlined_call_operand.vmem [shape: bf16[9,32,4], index: 1, kind: input, shape index: {}]
  %s2 = inlined_call_operand.vmem [shape: f32[32,1], index: 2, kind: input, shape index: {}]
  %s3 = inlined_call_operand.vmem [shape: f32[32,1], index: 3, kind: input, shape index: {}]
  %s4 = inlined_call_operand.vmem [shape: f32[1,384], index: 4, kind: input, shape index: {}]
  %s5 = inlined_call_operand.hbm [shape: f32[2,32,384], index: 5, kind: output, shape index: {}]
  %s6 = sld [smem:[#allocation0]]
  $region53: #{tpu_custom_call.1} parent=0
    _
  %s8 = ssub.s32 1, %s6
  %s9 = scalar_select 0, %s8, %s6
  $region1: #{tpu_custom_call.1} parent=0
    #allocation2 [shape = 'u8[98304]{0}', space=vmem, size = 0x18000, scoped, tag = 'output window, operand 0']
    #allocation3 [shape = 's32[2]{0}', space=sflag, size = 0x8, scoped, tag = 'scoped memory for tpu_custom_call.1']
    %10 = vsyncpa [#allocation3], 0
    %s11 = scalar_lea.sflag [#allocation3], 1
    %12 = vsyncpa %s11, 0
    loop: start=0, step=1, limit=4
    $region2: #{tpu_custom_call.1} parent=1 // loop_pre_header
      _
    $region3: #{tpu_custom_call.1} parent=1 // loop_header
      %s14 = sphi 0, %s18
      %p15 = scmp.ge.s32.totalorder %s14, 4
      %s24 = sphi 0, %s26
      %s27 = sphi 0, %s24
      %s28 = sphi 0, %s27
      %s44 = sphi 0, %s28
      %s48 = sphi 0, %s48
      %s50 = sphi 0, %s48
      %s51 = sphi 0, %s50
      %s65 = sphi 0, %s51
      %s69 = sphi 0, %s69
      %s71 = sphi 0, %s69
      %s72 = sphi 0, %s71
      %s86 = sphi 0, %s72
      %s90 = sphi 0, %s90
      %s92 = sphi 0, %s90
      %s93 = sphi 0, %s92
      %s107 = sphi 0, %s93
      %s111 = sphi 0, %s111
      %s113 = sphi 0, %s111
      %s114 = sphi 0, %s113
      %s128 = sphi 0, %s114
      %s134 = sphi 0, %s136
      %s137 = sphi 0, %s134
      %s138 = sphi 0, %s137
      %s154 = sphi 0, %s138
    $region4: #{tpu_custom_call.1} parent=1 // loop_header_branch
      %17 = sbr.rel (%p15) target = $region8
    $region5: #{tpu_custom_call.1} parent=1 // loop_body
      %s19 = ssub.s32 %s14, 1
      %s20 = ssub.s32 %s14, 2
      %s21 = sadd.s32 %s14, 1
      %s22 = ssub.s32 %s14, %s21
      %p23 = scmp.eq.s32.totalorder %s22, 0
      %s25 = sadd.s32 %s24, 1
      %s26 = scalar_select %p23, %s24, %s25
      %p29 = pneg %p23
      %p30 = scmp.eq.s32.totalorder %s14, 1
      %p31 = por %p29, %p30
      %p32 = scmp.ne.s32.totalorder %s24, %s27
      %p33 = scmp.eq.s32.totalorder %s14, 0
      %p34 = por %p32, %p33
      %p35 = scmp.ne.s32.totalorder %s24, %s27
      %p36 = scmp.eq.s32.totalorder %s19, 1
      %p37 = por %p35, %p36
      %p38 = scmp.ne.s32.totalorder %s27, %s28
      %p39 = scmp.eq.s32.totalorder %s19, 0
      %p40 = por %p38, %p39
      %p41 = scmp.ne.s32.totalorder %s27, %s28
      %p42 = scmp.eq.s32.totalorder %s20, 1
      %p43 = por %p41, %p42
      %p45 = scmp.ne.s32.totalorder %s28, %s44
      %p46 = scmp.eq.s32.totalorder %s20, 0
      %p47 = por %p45, %p46
      %s49 = sadd.s32 %s48, 1
      %p52 = scmp.eq.s32.totalorder %s14, 1
      %p53 = scmp.ne.s32.totalorder %s48, %s50
      %p54 = scmp.eq.s32.totalorder %s14, 0
      %p55 = por %p53, %p54
      %p56 = scmp.ne.s32.totalorder %s48, %s50
      %p57 = scmp.eq.s32.totalorder %s19, 1
      %p58 = por %p56, %p57
      %p59 = scmp.ne.s32.totalorder %s50, %s51
      %p60 = scmp.eq.s32.totalorder %s19, 0
      %p61 = por %p59, %p60
      %p62 = scmp.ne.s32.totalorder %s50, %s51
      %p63 = scmp.eq.s32.totalorder %s20, 1
      %p64 = por %p62, %p63
      %p66 = scmp.ne.s32.totalorder %s51, %s65
      %p67 = scmp.eq.s32.totalorder %s20, 0
      %p68 = por %p66, %p67
      %s70 = sadd.s32 %s69, 1
      %p73 = scmp.eq.s32.totalorder %s14, 1
      %p74 = scmp.ne.s32.totalorder %s69, %s71
      %p75 = scmp.eq.s32.totalorder %s14, 0
      %p76 = por %p74, %p75
      %p77 = scmp.ne.s32.totalorder %s69, %s71
      %p78 = scmp.eq.s32.totalorder %s19, 1
      %p79 = por %p77, %p78
      %p80 = scmp.ne.s32.totalorder %s71, %s72
      %p81 = scmp.eq.s32.totalorder %s19, 0
      %p82 = por %p80, %p81
      %p83 = scmp.ne.s32.totalorder %s71, %s72
      %p84 = scmp.eq.s32.totalorder %s20, 1
      %p85 = por %p83, %p84
      %p87 = scmp.ne.s32.totalorder %s72, %s86
      %p88 = scmp.eq.s32.totalorder %s20, 0
      %p89 = por %p87, %p88
      %s91 = sadd.s32 %s90, 1
      %p94 = scmp.eq.s32.totalorder %s14, 1
      %p95 = scmp.ne.s32.totalorder %s90, %s92
      %p96 = scmp.eq.s32.totalorder %s14, 0
      %p97 = por %p95, %p96
      %p98 = scmp.ne.s32.totalorder %s90, %s92
      %p99 = scmp.eq.s32.totalorder %s19, 1
      %p100 = por %p98, %p99
      %p101 = scmp.ne.s32.totalorder %s92, %s93
      %p102 = scmp.eq.s32.totalorder %s19, 0
      %p103 = por %p101, %p102
      %p104 = scmp.ne.s32.totalorder %s92, %s93
      %p105 = scmp.eq.s32.totalorder %s20, 1
      %p106 = por %p104, %p105
      %p108 = scmp.ne.s32.totalorder %s93, %s107
      %p109 = scmp.eq.s32.totalorder %s20, 0
      %p110 = por %p108, %p109
      %s112 = sadd.s32 %s111, 1
      %p115 = scmp.eq.s32.totalorder %s14, 1
      %p116 = scmp.ne.s32.totalorder %s111, %s113
      %p117 = scmp.eq.s32.totalorder %s14, 0
      %p118 = por %p116, %p117
      %p119 = scmp.ne.s32.totalorder %s111, %s113
      %p120 = scmp.eq.s32.totalorder %s19, 1
      %p121 = por %p119, %p120
      %p122 = scmp.ne.s32.totalorder %s113, %s114
      %p123 = scmp.eq.s32.totalorder %s19, 0
      %p124 = por %p122, %p123
      %p125 = scmp.ne.s32.totalorder %s113, %s114
      %p126 = scmp.eq.s32.totalorder %s20, 1
      %p127 = por %p125, %p126
      %p129 = scmp.ne.s32.totalorder %s114, %s128
      %p130 = scmp.eq.s32.totalorder %s20, 0
      %p131 = por %p129, %p130
      %s132 = ssub.s32 %s14, %s21
      %p133 = scmp.eq.s32.totalorder %s132, 0
      %s135 = sadd.s32 %s134, 1
      %s136 = scalar_select %p133, %s134, %s135
      %p139 = pneg %p133
      %p140 = scmp.eq.s32.totalorder %s14, 1
      %p141 = por %p139, %p140
      %p142 = scmp.ne.s32.totalorder %s134, %s137
      %p143 = scmp.eq.s32.totalorder %s14, 0
      %p144 = por %p142, %p143
      %p145 = scmp.ne.s32.totalorder %s134, %s137
      %p146 = scmp.eq.s32.totalorder %s19, 1
      %p147 = por %p145, %p146
      %p148 = scmp.ne.s32.totalorder %s137, %s138
      %p149 = scmp.eq.s32.totalorder %s19, 0
      %p150 = por %p148, %p149
      %p151 = scmp.ne.s32.totalorder %s137, %s138
      %p152 = scmp.eq.s32.totalorder %s20, 1
      %p153 = por %p151, %p152
      %p155 = scmp.ne.s32.totalorder %s138, %s154
      %p156 = scmp.eq.s32.totalorder %s20, 0
      %p157 = por %p155, %p156
      %p158 = scmp.le.s32.totalorder 1, %s14
      %p159 = scmp.lt.s32.totalorder %s14, 3
      %p160 = pnand %p158, %p159
      %p161 = pneg %p160
      // Predicated region
      $region9: #{tpu_custom_call.1} parent=5 // pred_check
        _
      $region10: #{tpu_custom_call.1} parent=5 // pred_check_branch
        %163 = sbr.rel (%p160) target = $region12
      $region11: #{tpu_custom_call.1} parent=5 // pred_region
        %s164 = ssub.s32 %s14, 1
        // Predicated region
        $region13: #{tpu_custom_call.1} parent=11 // pred_check
          %p165 = pneg %p61
        $region14: #{tpu_custom_call.1} parent=11 // pred_check_branch
          %167 = sbr.rel (%p165) target = $region16
        $region15: #{tpu_custom_call.1} parent=11 // pred_region
          _
        $region16: #{tpu_custom_call.1} parent=11 // pred_fallthru
          _
        // Predicated region
        $region17: #{tpu_custom_call.1} parent=11 // pred_check
          %p168 = pneg %p82
        $region18: #{tpu_custom_call.1} parent=11 // pred_check_branch
          %170 = sbr.rel (%p168) target = $region20
        $region19: #{tpu_custom_call.1} parent=11 // pred_region
          _
        $region20: #{tpu_custom_call.1} parent=11 // pred_fallthru
          _
        // Predicated region
        $region21: #{tpu_custom_call.1} parent=11 // pred_check
          %p171 = pneg %p103
        $region22: #{tpu_custom_call.1} parent=11 // pred_check_branch
          %173 = sbr.rel (%p171) target = $region24
        $region23: #{tpu_custom_call.1} parent=11 // pred_region
          _
        $region24: #{tpu_custom_call.1} parent=11 // pred_fallthru
          _
        // Predicated region
        $region25: #{tpu_custom_call.1} parent=11 // pred_check
          %p174 = pneg %p124
        $region26: #{tpu_custom_call.1} parent=11 // pred_check_branch
          %176 = sbr.rel (%p174) target = $region28
        $region27: #{tpu_custom_call.1} parent=11 // pred_region
          _
        $region28: #{tpu_custom_call.1} parent=11 // pred_fallthru
          _
      $region12: #{tpu_custom_call.1} parent=5 // pred_fallthru
        _
      %p177 = scmp.lt.s32.totalorder %s14, 2
      // Predicated region
      $region29: #{tpu_custom_call.1} parent=5 // pred_check
        %p178 = pneg %p177
      $region30: #{tpu_custom_call.1} parent=5 // pred_check_branch
        %180 = sbr.rel (%p178) target = $region32
      $region31: #{tpu_custom_call.1} parent=5 // pred_region
        // Predicated region
        $region33: #{tpu_custom_call.1} parent=31 // pred_check
          %p181 = pneg %p34
        $region34: #{tpu_custom_call.1} parent=31 // pred_check_branch
          %183 = sbr.rel (%p181) target = $region36
        $region35: #{tpu_custom_call.1} parent=31 // pred_region
          %p184 = scmp.lt.s32.totalorder %s14, 1
          %s185 = scalar_select %p184, %s14, 1
          %s186 = smul.addr %s185, 4
          %s187 = smul.addr %s186, 2
          %s188 = scalar_lea.vmem %s0, %s187
        $region36: #{tpu_custom_call.1} parent=31 // pred_fallthru
          _
      $region32: #{tpu_custom_call.1} parent=5 // pred_fallthru
        _
      %p189 = scmp.le.s32.totalorder 1, %s14
      %p190 = scmp.lt.s32.totalorder %s14, 3
      %p191 = pnand %p189, %p190
      %p192 = pneg %p191
      // Predicated region
      $region37: #{tpu_custom_call.1} parent=5 // pred_check
        _
      $region38: #{tpu_custom_call.1} parent=5 // pred_check_branch
        %194 = sbr.rel (%p191) target = $region40
      $region39: #{tpu_custom_call.1} parent=5 // pred_region
        %s195 = ssub.s32 %s14, 1
        %p196 = scmp.lt.s32.totalorder %s19, 1
        %s197 = scalar_select %p196, %s19, 1
        %s198 = smul.addr %s197, 4
        %s199 = smul.addr %s198, 2
        %s200 = scalar_lea.vmem %s0, %s199
        %p201 = pneg %p40
        %p202 = pneg %p37
        %p203 = pneg %p61
        %p204 = pneg %p58
        %p205 = pneg %p82
        %p206 = pneg %p79
        %p207 = pneg %p103
        %p208 = pneg %p100
        %p209 = pneg %p124
        %p210 = pneg %p121
        %p211 = pneg %p150
        %p212 = pneg %p147
        %s213 = sand.u32 %s137, 1
        %s214 = scalar_lea.sflag [#allocation3], %s213
        %s215 = sand.u32 %s137, 1
        %s216 = smul.addr %s215, 96
        %s217 = scalar_lea.vmem [#allocation2], %s216
        %p218 = scmp.lt.s32.totalorder %s19, 1
        %s219 = scalar_select %p218, %s19, 1
        %s220 = smul.addr %s219, 4
        %s221 = smul.addr %s220, 2
        %s222 = scalar_lea.vmem %s0, %s221
        %v224 = vld [vmem:[%s4] sm:$0x7]
        %v225 = vlaneseq
        %v226 = vshrl.u32 %v225, 7
        %v227 = vadd.s32 %v226, 8
        %v228 = vadd.s32 %v226, 16
        %v229 = vadd.s32 %v226, 24
        %v230 = vlaneseq
        %v231 = vand.u32 %v230, 127
        %v232 = vmul.u32 %v231, 4
        %vm233 = vcmp.ge.s32.totalorder %v226, %v232
        %vm234 = vcmp.ge.s32.totalorder %v227, %v232
        %vm235 = vcmp.ge.s32.totalorder %v228, %v232
        %vm236 = vcmp.ge.s32.totalorder %v229, %v232
        %v237 = vadd.s32 %v232, 4
        %vm238 = vcmp.lt.s32.totalorder %v226, %v237
        %vm239 = vcmp.lt.s32.totalorder %v227, %v237
        %vm240 = vcmp.lt.s32.totalorder %v228, %v237
        %vm241 = vcmp.lt.s32.totalorder %v229, %v237
        %vm242 = vmand %vm233, %vm238
        %vm243 = vmand %vm234, %vm239
        %vm244 = vmand %vm235, %vm240
        %vm245 = vmand %vm236, %vm241
        %v246 = vsel %vm242, 1.0, 0.0
        %v247 = vsel %vm243, 1.0, 0.0
        %v248 = vsel %vm244, 1.0, 0.0
        %v249 = vsel %vm245, 1.0, 0.0
        %v250 = vld [vmem:[%s222] sm:$0x3f]
        %v251 = vld [vmem:[%s1] sm:$0xf]
        %v252 = vld [vmem:[%s1 + $0x4] sm:$0xf]
        %v253 = vld [vmem:[%s1 + $0x8] sm:$0xf]
        %v254 = vld [vmem:[%s1 + $0xc] sm:$0xf]
        %v255 = vld [vmem:[%s222] sm:$0xff]
        %s256 = scalar_lea.vmem %s1, 16
        %v257 = vld [vmem:[%s256] sm:$0xf]
        %v258 = vld [vmem:[%s256 + $0x4] sm:$0xf]
        %v259 = vld [vmem:[%s256 + $0x8] sm:$0xf]
        %v260 = vld [vmem:[%s256 + $0xc] sm:$0xf]
        %v265 = vunpack.c.l.b16 %v257
        %v266 = vunpack.c.l.b16 %v258
        %v267 = vunpack.c.l.b16 %v259
        %v268 = vunpack.c.l.b16 %v260
        %v269 = vpack.c.b16 %v266, %v265
        %v270 = vpack.c.b16 %v268, %v267
        %v272 = vcombine.high %v255, %v255
        %v274 = vunpack.c.l.s4 1983009808
        %v275 = vunpack.c.0.s8 %v274
        %v276 = vlaneseq
        %v277 = vshrl.u32 %v276, 7
        %v278 = vsub.s32 %v275, %v277
        %v279 = vrot.slane %v255, %v278
        %v281 = vunpack.c.l.s4 1983009808
        %v282 = vunpack.c.0.s8 %v281
        %v283 = vlaneseq
        %v284 = vshrl.u32 %v283, 7
        %v285 = vsub.s32 %v282, %v284
        %v286 = vrot.slane %v272, %v285
        %v287 = vcombine.high %v279, %v279
        %v288 = vcombine.high %v286, %v286
        %289 = vrot.lane.b32.xlu0 %v279, 127
        %v290 = vpop.permute.xlu0 %289
        %291 = vrot.lane.b32.xlu0 %v287, 127
        %v292 = vpop.permute.xlu0 %291
        %293 = vrot.lane.b32.xlu0 %v286, 127
        %v294 = vpop.permute.xlu0 %293
        %295 = vrot.lane.b32.xlu0 %v288, 127
        %v296 = vpop.permute.xlu0 %295
        %vm297 = vcmask 1039360
        %v298 = vsel %vm297, %v290, %v292
        %v299 = vsel %vm297, %v292, %v294
        %v300 = vsel %vm297, %v294, %v296
        %vm301 = vcmask 31744
        %v303 = vsel %vm301, %v269, 0
        %v306 = vsel %vm301, %v270, 0
        %vm308 = vcmask 1041408
        %v310 = vsel %vm308, %v298, 0
        %v313 = vsel %vm308, %v299, 0
        %v316 = vsel %vm308, %v300, 0
        %318 = vmatprep.subr.bf16.mxu0 %v313
        %319 = vmatpush1.bf16.msra.mxu0 %v310
        %320 = vmatprep.subr.bf16.mxu0 0
        %321 = vmatpush1.bf16.msra.mxu0 0
        %322 = vmatprep.subr.bf16.mxu0 0
        %323 = vmatpush1.bf16.msra.mxu0 0
        %324 = vmatprep.subr.bf16.mxu0 0
        %325 = vmatpush1.bf16.msra.mxu0 0
        %326 = vmatprep.subr.bf16.mxu0 0
        %327 = vmatpush1.bf16.msra.mxu0 0
        %328 = vmatprep.subr.bf16.mxu0 0
        %329 = vmatpush1.bf16.msra.mxu0 0
        %330 = vmatprep.subr.bf16.mxu0 0
        %331 = vmatpush1.bf16.msra.mxu0 0
        %332 = vmatprep.subr.bf16.mxu0 0
        %333 = vmatpush1.bf16.msra.mxu0 0
        %334 = vmatprep.subr.bf16.mxu0 0
        %335 = vmatpush1.bf16.msra.mxu0 0
        %336 = vmatprep.subr.bf16.mxu0 0
        %337 = vmatpush1.bf16.msra.mxu0 0
        %338 = vmatprep.subr.bf16.mxu0 0
        %339 = vmatpush1.bf16.msra.mxu0 0
        %340 = vmatprep.subr.bf16.mxu0 0
        %341 = vmatpush1.bf16.msra.mxu0 0
        %342 = vmatprep.subr.bf16.mxu0 0
        %343 = vmatpush1.bf16.msra.mxu0 0
        %344 = vmatprep.subr.bf16.mxu0 0
        %345 = vmatpush1.bf16.msra.mxu0 0
        %346 = vmatprep.subr.bf16.mxu0 0
        %347 = vmatpush1.bf16.msra.mxu0 0
        %348 = vmatprep.subr.bf16.mxu0 0
        %349 = vmatpush1.bf16.msra.mxu0 0
        %350 = vmatprep.mubr.bf16.mxu0 0
        %351 = vmatmul.mubr.bf16.gmra.mrb[0].mxu0 %v303
        %v352 = vpop.f32.mrb[0].mxu0
        %v353 = vadd.f32 0.0, %v352
        %v354 = vpop.f32.mrb[0].mxu0
        %v355 = vadd.f32 0.0, %v354
        %v356 = vpop.f32.mrb[0].mxu0
        %v357 = vadd.f32 0.0, %v356
        %v358 = vpop.f32.mrb[0].mxu0
        %v359 = vadd.f32 0.0, %v358
        %360 = vmatprep.mubr.bf16.mxu0 0
        %361 = vmatmul.mubr.bf16.gmra.mrb[0].mxu0 %v306
        %v362 = vpop.f32.mrb[0].mxu0
        %v363 = vadd.f32 0.0, %v362
        %v364 = vpop.f32.mrb[0].mxu0
        %v365 = vadd.f32 0.0, %v364
        %v366 = vpop.f32.mrb[0].mxu0
        %v367 = vadd.f32 0.0, %v366
        %v368 = vpop.f32.mrb[0].mxu0
        %v369 = vadd.f32 0.0, %v368
        %370 = vdwg.mxu0
        %371 = vmatprep.subr.bf16.mxu0 0
        %372 = vmatpush1.bf16.msra.mxu0 %v316
        %373 = vmatprep.subr.bf16.mxu0 0
        %374 = vmatpush1.bf16.msra.mxu0 0
        %375 = vmatprep.subr.bf16.mxu0 0
        %376 = vmatpush1.bf16.msra.mxu0 0
        %377 = vmatprep.subr.bf16.mxu0 0
        %378 = vmatpush1.bf16.msra.mxu0 0
        %379 = vmatprep.subr.bf16.mxu0 0
        %380 = vmatpush1.bf16.msra.mxu0 0
        %381 = vmatprep.subr.bf16.mxu0 0
        %382 = vmatpush1.bf16.msra.mxu0 0
        %383 = vmatprep.subr.bf16.mxu0 0
        %384 = vmatpush1.bf16.msra.mxu0 0
        %385 = vmatprep.subr.bf16.mxu0 0
        %386 = vmatpush1.bf16.msra.mxu0 0
        %387 = vmatprep.subr.bf16.mxu0 0
        %388 = vmatpush1.bf16.msra.mxu0 0
        %389 = vmatprep.subr.bf16.mxu0 0
        %390 = vmatpush1.bf16.msra.mxu0 0
        %391 = vmatprep.subr.bf16.mxu0 0
        %392 = vmatpush1.bf16.msra.mxu0 0
        %393 = vmatprep.subr.bf16.mxu0 0
        %394 = vmatpush1.bf16.msra.mxu0 0
        %395 = vmatprep.subr.bf16.mxu0 0
        %396 = vmatpush1.bf16.msra.mxu0 0
        %397 = vmatprep.subr.bf16.mxu0 0
        %398 = vmatpush1.bf16.msra.mxu0 0
        %399 = vmatprep.subr.bf16.mxu0 0
        %400 = vmatpush1.bf16.msra.mxu0 0
        %401 = vmatprep.subr.bf16.mxu0 0
        %402 = vmatpush1.bf16.msra.mxu0 0
        %403 = vmatprep.mubr.bf16.mxu0 0
        %404 = vmatmul.mubr.bf16.gmra.mrb[0].mxu0 %v303
        %v405 = vpop.f32.mrb[0].mxu0
        %v406 = vadd.f32 0.0, %v405
        %v407 = vpop.f32.mrb[0].mxu0
        %v408 = vpop.f32.mrb[0].mxu0
        %v409 = vadd.f32 0.0, %v408
        %v410 = vpop.f32.mrb[0].mxu0
        %411 = vmatprep.mubr.bf16.mxu0 0
        %412 = vmatmul.mubr.bf16.gmra.mrb[0].mxu0 %v306
        %v413 = vpop.f32.mrb[0].mxu0
        %v414 = vadd.f32 0.0, %v413
        %v415 = vpop.f32.mrb[0].mxu0
        %v416 = vpop.f32.mrb[0].mxu0
        %v417 = vadd.f32 0.0, %v416
        %v418 = vpop.f32.mrb[0].mxu0
        %419 = vdwg.mxu0
        %v424 = vunpack.c.l.b16 %v251
        %v425 = vunpack.c.l.b16 %v252
        %v426 = vunpack.c.l.b16 %v253
        %v427 = vunpack.c.l.b16 %v254
        %v428 = vpack.c.b16 %v425, %v424
        %v429 = vpack.c.b16 %v427, %v426
        %v431 = vcombine.high %v250, %v250
        %v433 = vunpack.c.l.s4 1983009808
        %v434 = vunpack.c.0.s8 %v433
        %v435 = vlaneseq
        %v436 = vshrl.u32 %v435, 7
        %v437 = vsub.s32 %v434, %v436
        %v438 = vrot.slane %v250, %v437
        %v440 = vunpack.c.l.s4 1983009808
        %v441 = vunpack.c.0.s8 %v440
        %v442 = vlaneseq
        %v443 = vshrl.u32 %v442, 7
        %v444 = vsub.s32 %v441, %v443
        %v445 = vrot.slane %v431, %v444
        %v446 = vcombine.high %v438, %v438
        %v448 = vsel %vm301, %v428, 0
        %v451 = vsel %vm301, %v429, 0
        %v454 = vsel %vm308, %v438, 0
        %v457 = vsel %vm308, %v446, 0
        %v460 = vsel %vm308, %v445, 0
        %462 = vmatprep.subr.bf16.mxu0 %v457
        %463 = vmatpush1.bf16.msra.mxu0 %v454
        %464 = vmatprep.subr.bf16.mxu0 0
        %465 = vmatpush1.bf16.msra.mxu0 0
        %466 = vmatprep.subr.bf16.mxu0 0
        %467 = vmatpush1.bf16.msra.mxu0 0
        %468 = vmatprep.subr.bf16.mxu0 0
        %469 = vmatpush1.bf16.msra.mxu0 0
        %470 = vmatprep.subr.bf16.mxu0 0
        %471 = vmatpush1.bf16.msra.mxu0 0
        %472 = vmatprep.subr.bf16.mxu0 0
        %473 = vmatpush1.bf16.msra.mxu0 0
        %474 = vmatprep.subr.bf16.mxu0 0
        %475 = vmatpush1.bf16.msra.mxu0 0
        %476 = vmatprep.subr.bf16.mxu0 0
        %477 = vmatpush1.bf16.msra.mxu0 0
        %478 = vmatprep.subr.bf16.mxu0 0
        %479 = vmatpush1.bf16.msra.mxu0 0
        %480 = vmatprep.subr.bf16.mxu0 0
        %481 = vmatpush1.bf16.msra.mxu0 0
        %482 = vmatprep.subr.bf16.mxu0 0
        %483 = vmatpush1.bf16.msra.mxu0 0
        %484 = vmatprep.subr.bf16.mxu0 0
        %485 = vmatpush1.bf16.msra.mxu0 0
        %486 = vmatprep.subr.bf16.mxu0 0
        %487 = vmatpush1.bf16.msra.mxu0 0
        %488 = vmatprep.subr.bf16.mxu0 0
        %489 = vmatpush1.bf16.msra.mxu0 0
        %490 = vmatprep.subr.bf16.mxu0 0
        %491 = vmatpush1.bf16.msra.mxu0 0
        %492 = vmatprep.subr.bf16.mxu0 0
        %493 = vmatpush1.bf16.msra.mxu0 0
        %494 = vmatprep.mubr.bf16.mxu0 0
        %495 = vmatmul.mubr.bf16.gmra.mrb[0].mxu0 %v448
        %v496 = vpop.f32.mrb[0].mxu0
        %v497 = vadd.f32 %v353, %v496
        %v498 = vpop.f32.mrb[0].mxu0
        %v499 = vadd.f32 %v355, %v498
        %v500 = vpop.f32.mrb[0].mxu0
        %v501 = vadd.f32 %v357, %v500
        %v502 = vpop.f32.mrb[0].mxu0
        %v503 = vadd.f32 %v359, %v502
        %504 = vmatprep.mubr.bf16.mxu0 0
        %505 = vmatmul.mubr.bf16.gmra.mrb[0].mxu0 %v451
        %v506 = vpop.f32.mrb[0].mxu0
        %v507 = vadd.f32 %v363, %v506
        %v508 = vpop.f32.mrb[0].mxu0
        %v509 = vadd.f32 %v365, %v508
        %v510 = vpop.f32.mrb[0].mxu0
        %v511 = vadd.f32 %v367, %v510
        %v512 = vpop.f32.mrb[0].mxu0
        %v513 = vadd.f32 %v369, %v512
        %514 = vdwg.mxu0
        %515 = vmatprep.subr.bf16.mxu0 0
        %516 = vmatpush1.bf16.msra.mxu0 %v460
        %517 = vmatprep.subr.bf16.mxu0 0
        %518 = vmatpush1.bf16.msra.mxu0 0
        %519 = vmatprep.subr.bf16.mxu0 0
        %520 = vmatpush1.bf16.msra.mxu0 0
        %521 = vmatprep.subr.bf16.mxu0 0
        %522 = vmatpush1.bf16.msra.mxu0 0
        %523 = vmatprep.subr.bf16.mxu0 0
        %524 = vmatpush1.bf16.msra.mxu0 0
        %525 = vmatprep.subr.bf16.mxu0 0
        %526 = vmatpush1.bf16.msra.mxu0 0
        %527 = vmatprep.subr.bf16.mxu0 0
        %528 = vmatpush1.bf16.msra.mxu0 0
        %529 = vmatprep.subr.bf16.mxu0 0
        %530 = vmatpush1.bf16.msra.mxu0 0
        %531 = vmatprep.subr.bf16.mxu0 0
        %532 = vmatpush1.bf16.msra.mxu0 0
        %533 = vmatprep.subr.bf16.mxu0 0
        %534 = vmatpush1.bf16.msra.mxu0 0
        %535 = vmatprep.subr.bf16.mxu0 0
        %536 = vmatpush1.bf16.msra.mxu0 0
        %537 = vmatprep.subr.bf16.mxu0 0
        %538 = vmatpush1.bf16.msra.mxu0 0
        %539 = vmatprep.subr.bf16.mxu0 0
        %540 = vmatpush1.bf16.msra.mxu0 0
        %541 = vmatprep.subr.bf16.mxu0 0
        %542 = vmatpush1.bf16.msra.mxu0 0
        %543 = vmatprep.subr.bf16.mxu0 0
        %544 = vmatpush1.bf16.msra.mxu0 0
        %545 = vmatprep.subr.bf16.mxu0 0
        %546 = vmatpush1.bf16.msra.mxu0 0
        %547 = vmatprep.mubr.bf16.mxu0 0
        %548 = vmatmul.mubr.bf16.gmra.mrb[0].mxu0 %v448
        %v549 = vpop.f32.mrb[0].mxu0
        %v550 = vadd.f32 %v406, %v549
        %v551 = vpop.f32.mrb[0].mxu0
        %v552 = vpop.f32.mrb[0].mxu0
        %v553 = vadd.f32 %v409, %v552
        %v554 = vpop.f32.mrb[0].mxu0
        %555 = vmatprep.mubr.bf16.mxu0 0
        %556 = vmatmul.mubr.bf16.gmra.mrb[0].mxu0 %v451
        %v557 = vpop.f32.mrb[0].mxu0
        %v558 = vadd.f32 %v414, %v557
        %v559 = vpop.f32.mrb[0].mxu0
        %v560 = vpop.f32.mrb[0].mxu0
        %v561 = vadd.f32 %v417, %v560
        %v562 = vpop.f32.mrb[0].mxu0
        %563 = vdwg.mxu0
        %v564 = vld [vmem:[%s222] sm:$0xff]
        %s565 = scalar_lea.vmem %s1, 32
        %v566 = vld [vmem:[%s565] sm:$0xf]
        %v567 = vld [vmem:[%s565 + $0x4] sm:$0xf]
        %v568 = vld [vmem:[%s565 + $0x8] sm:$0xf]
        %v569 = vld [vmem:[%s565 + $0xc] sm:$0xf]
        %v574 = vunpack.c.l.b16 %v566
        %v575 = vunpack.c.l.b16 %v567
        %v576 = vunpack.c.l.b16 %v568
        %v577 = vunpack.c.l.b16 %v569
        %v578 = vpack.c.b16 %v575, %v574
        %v579 = vpack.c.b16 %v577, %v576
        %v581 = vcombine.high %v564, %v564
        %v583 = vunpack.c.l.s4 1983009808
        %v584 = vunpack.c.0.s8 %v583
        %v585 = vlaneseq
        %v586 = vshrl.u32 %v585, 7
        %v587 = vsub.s32 %v584, %v586
        %v588 = vrot.slane %v564, %v587
        %v590 = vunpack.c.l.s4 1983009808
        %v591 = vunpack.c.0.s8 %v590
        %v592 = vlaneseq
        %v593 = vshrl.u32 %v592, 7
        %v594 = vsub.s32 %v591, %v593
        %v595 = vrot.slane %v581, %v594
        %v596 = vcombine.high %v588, %v588
        %v597 = vcombine.high %v595, %v595
        %598 = vrot.lane.b32.xlu0 %v588, 126
        %v599 = vpop.permute.xlu0 %598
        %600 = vrot.lane.b32.xlu0 %v596, 126
        %v601 = vpop.permute.xlu0 %600
        %602 = vrot.lane.b32.xlu0 %v595, 126
        %v603 = vpop.permute.xlu0 %602
        %604 = vrot.lane.b32.xlu0 %v597, 126
        %v605 = vpop.permute.xlu0 %604
        %vm606 = vcmask 1031168
        %v607 = vsel %vm606, %v599, %v601
        %v608 = vsel %vm606, %v601, %v603
        %v609 = vsel %vm606, %v603, %v605
        %v611 = vsel %vm301, %v578, 0
        %v614 = vsel %vm301, %v579, 0
        %v617 = vsel %vm308, %v607, 0
        %v620 = vsel %vm308, %v608, 0
        %v623 = vsel %vm308, %v609, 0
        %625 = vmatprep.subr.bf16.mxu0 %v620
        %626 = vmatpush1.bf16.msra.mxu0 %v617
        %627 = vmatprep.subr.bf16.mxu0 0
        %628 = vmatpush1.bf16.msra.mxu0 0
        %629 = vmatprep.subr.bf16.mxu0 0
        %630 = vmatpush1.bf16.msra.mxu0 0
        %631 = vmatprep.subr.bf16.mxu0 0
        %632 = vmatpush1.bf16.msra.mxu0 0
        %633 = vmatprep.subr.bf16.mxu0 0
        %634 = vmatpush1.bf16.msra.mxu0 0
        %635 = vmatprep.subr.bf16.mxu0 0
        %636 = vmatpush1.bf16.msra.mxu0 0
        %637 = vmatprep.subr.bf16.mxu0 0
        %638 = vmatpush1.bf16.msra.mxu0 0
        %639 = vmatprep.subr.bf16.mxu0 0
        %640 = vmatpush1.bf16.msra.mxu0 0
        %641 = vmatprep.subr.bf16.mxu0 0
        %642 = vmatpush1.bf16.msra.mxu0 0
        %643 = vmatprep.subr.bf16.mxu0 0
        %644 = vmatpush1.bf16.msra.mxu0 0
        %645 = vmatprep.subr.bf16.mxu0 0
        %646 = vmatpush1.bf16.msra.mxu0 0
        %647 = vmatprep.subr.bf16.mxu0 0
        %648 = vmatpush1.bf16.msra.mxu0 0
        %649 = vmatprep.subr.bf16.mxu0 0
        %650 = vmatpush1.bf16.msra.mxu0 0
        %651 = vmatprep.subr.bf16.mxu0 0
        %652 = vmatpush1.bf16.msra.mxu0 0
        %653 = vmatprep.subr.bf16.mxu0 0
        %654 = vmatpush1.bf16.msra.mxu0 0
        %655 = vmatprep.subr.bf16.mxu0 0
        %656 = vmatpush1.bf16.msra.mxu0 0
        %657 = vmatprep.mubr.bf16.mxu0 0
        %658 = vmatmul.mubr.bf16.gmra.mrb[0].mxu0 %v611
        %v659 = vpop.f32.mrb[0].mxu0
        %v660 = vadd.f32 0.0, %v659
        %v661 = vpop.f32.mrb[0].mxu0
        %v662 = vadd.f32 0.0, %v661
        %v663 = vpop.f32.mrb[0].mxu0
        %v664 = vadd.f32 0.0, %v663
        %v665 = vpop.f32.mrb[0].mxu0
        %v666 = vadd.f32 0.0, %v665
        %667 = vmatprep.mubr.bf16.mxu0 0
        %668 = vmatmul.mubr.bf16.gmra.mrb[0].mxu0 %v614
        %v669 = vpop.f32.mrb[0].mxu0
        %v670 = vadd.f32 0.0, %v669
        %v671 = vpop.f32.mrb[0].mxu0
        %v672 = vadd.f32 0.0, %v671
        %v673 = vpop.f32.mrb[0].mxu0
        %v674 = vadd.f32 0.0, %v673
        %v675 = vpop.f32.mrb[0].mxu0
        %v676 = vadd.f32 0.0, %v675
        %677 = vdwg.mxu0
        %678 = vmatprep.subr.bf16.mxu0 0
        %679 = vmatpush1.bf16.msra.mxu0 %v623
        %680 = vmatprep.subr.bf16.mxu0 0
        %681 = vmatpush1.bf16.msra.mxu0 0
        %682 = vmatprep.subr.bf16.mxu0 0
        %683 = vmatpush1.bf16.msra.mxu0 0
        %684 = vmatprep.subr.bf16.mxu0 0
        %685 = vmatpush1.bf16.msra.mxu0 0
        %686 = vmatprep.subr.bf16.mxu0 0
        %687 = vmatpush1.bf16.msra.mxu0 0
        %688 = vmatprep.subr.bf16.mxu0 0
        %689 = vmatpush1.bf16.msra.mxu0 0
        %690 = vmatprep.subr.bf16.mxu0 0
        %691 = vmatpush1.bf16.msra.mxu0 0
        %692 = vmatprep.subr.bf16.mxu0 0
        %693 = vmatpush1.bf16.msra.mxu0 0
        %694 = vmatprep.subr.bf16.mxu0 0
        %695 = vmatpush1.bf16.msra.mxu0 0
        %696 = vmatprep.subr.bf16.mxu0 0
        %697 = vmatpush1.bf16.msra.mxu0 0
        %698 = vmatprep.subr.bf16.mxu0 0
        %699 = vmatpush1.bf16.msra.mxu0 0
        %700 = vmatprep.subr.bf16.mxu0 0
        %701 = vmatpush1.bf16.msra.mxu0 0
        %702 = vmatprep.subr.bf16.mxu0 0
        %703 = vmatpush1.bf16.msra.mxu0 0
        %704 = vmatprep.subr.bf16.mxu0 0
        %705 = vmatpush1.bf16.msra.mxu0 0
        %706 = vmatprep.subr.bf16.mxu0 0
        %707 = vmatpush1.bf16.msra.mxu0 0
        %708 = vmatprep.subr.bf16.mxu0 0
        %709 = vmatpush1.bf16.msra.mxu0 0
        %710 = vmatprep.mubr.bf16.mxu0 0
        %711 = vmatmul.mubr.bf16.gmra.mrb[0].mxu0 %v611
        %v712 = vpop.f32.mrb[0].mxu0
        %v713 = vadd.f32 0.0, %v712
        %v714 = vpop.f32.mrb[0].mxu0
        %v715 = vpop.f32.mrb[0].mxu0
        %v716 = vadd.f32 0.0, %v715
        %v717 = vpop.f32.mrb[0].mxu0
        %718 = vmatprep.mubr.bf16.mxu0 0
        %719 = vmatmul.mubr.bf16.gmra.mrb[0].mxu0 %v614
        %v720 = vpop.f32.mrb[0].mxu0
        %v721 = vadd.f32 0.0, %v720
        %v722 = vpop.f32.mrb[0].mxu0
        %v723 = vpop.f32.mrb[0].mxu0
        %v724 = vadd.f32 0.0, %v723
        %v725 = vpop.f32.mrb[0].mxu0
        %726 = vdwg.mxu0
        %v727 = vadd.f32 %v497, %v660
        %v728 = vadd.f32 %v499, %v662
        %v729 = vadd.f32 %v550, %v713
        %v730 = vadd.f32 %v501, %v664
        %v731 = vadd.f32 %v503, %v666
        %v732 = vadd.f32 %v553, %v716
        %v733 = vadd.f32 %v507, %v670
        %v734 = vadd.f32 %v509, %v672
        %v735 = vadd.f32 %v558, %v721
        %v736 = vadd.f32 %v511, %v674
        %v737 = vadd.f32 %v513, %v676
        %v738 = vadd.f32 %v561, %v724
        %v739 = vld [vmem:[%s222] sm:$0xff]
        %s740 = scalar_lea.vmem %s1, 48
        %v741 = vld [vmem:[%s740] sm:$0xf]
        %v742 = vld [vmem:[%s740 + $0x4] sm:$0xf]
        %v743 = vld [vmem:[%s740 + $0x8] sm:$0xf]
        %v744 = vld [vmem:[%s740 + $0xc] sm:$0xf]
        %v749 = vunpack.c.l.b16 %v741
        %v750 = vunpack.c.l.b16 %v742
        %v751 = vunpack.c.l.b16 %v743
        %v752 = vunpack.c.l.b16 %v744
        %v753 = vpack.c.b16 %v750, %v749
        %v754 = vpack.c.b16 %v752, %v751
        %v756 = vcombine.high %v739, %v739
        %v758 = vunpack.c.l.s4 1983009808
        %v759 = vunpack.c.0.s8 %v758
        %v760 = vlaneseq
        %v761 = vshrl.u32 %v760, 7
        %v762 = vsub.s32 %v759, %v761
        %v763 = vrot.slane %v739, %v762
        %v765 = vunpack.c.l.s4 1983009808
        %v766 = vunpack.c.0.s8 %v765
        %v767 = vlaneseq
        %v768 = vshrl.u32 %v767, 7
        %v769 = vsub.s32 %v766, %v768
        %v770 = vrot.slane %v756, %v769
        %v771 = vcombine.high %v763, %v763
        %v772 = vcombine.high %v770, %v770
        %773 = vrot.lane.b32.xlu0 %v763, 110
        %v774 = vpop.permute.xlu0 %773
        %775 = vrot.lane.b32.xlu0 %v771, 110
        %v776 = vpop.permute.xlu0 %775
        %777 = vrot.lane.b32.xlu0 %v770, 110
        %v778 = vpop.permute.xlu0 %777
        %779 = vrot.lane.b32.xlu0 %v772, 110
        %v780 = vpop.permute.xlu0 %779
        %vm781 = vcmask 900096
        %v782 = vsel %vm781, %v774, %v776
        %v783 = vsel %vm781, %v776, %v778
        %v784 = vsel %vm781, %v778, %v780
        %v786 = vsel %vm301, %v753, 0
        %v789 = vsel %vm301, %v754, 0
        %v792 = vsel %vm308, %v782, 0
        %v795 = vsel %vm308, %v783, 0
        %v798 = vsel %vm308, %v784, 0
        %800 = vmatprep.subr.bf16.mxu0 %v795
        %801 = vmatpush1.bf16.msra.mxu0 %v792
        %802 = vmatprep.subr.bf16.mxu0 0
        %803 = vmatpush1.bf16.msra.mxu0 0
        %804 = vmatprep.subr.bf16.mxu0 0
        %805 = vmatpush1.bf16.msra.mxu0 0
        %806 = vmatprep.subr.bf16.mxu0 0
        %807 = vmatpush1.bf16.msra.mxu0 0
        %808 = vmatprep.subr.bf16.mxu0 0
        %809 = vmatpush1.bf16.msra.mxu0 0
        %810 = vmatprep.subr.bf16.mxu0 0
        %811 = vmatpush1.bf16.msra.mxu0 0
        %812 = vmatprep.subr.bf16.mxu0 0
        %813 = vmatpush1.bf16.msra.mxu0 0
        %814 = vmatprep.subr.bf16.mxu0 0
        %815 = vmatpush1.bf16.msra.mxu0 0
        %816 = vmatprep.subr.bf16.mxu0 0
        %817 = vmatpush1.bf16.msra.mxu0 0
        %818 = vmatprep.subr.bf16.mxu0 0
        %819 = vmatpush1.bf16.msra.mxu0 0
        %820 = vmatprep.subr.bf16.mxu0 0
        %821 = vmatpush1.bf16.msra.mxu0 0
        %822 = vmatprep.subr.bf16.mxu0 0
        %823 = vmatpush1.bf16.msra.mxu0 0
        %824 = vmatprep.subr.bf16.mxu0 0
        %825 = vmatpush1.bf16.msra.mxu0 0
        %826 = vmatprep.subr.bf16.mxu0 0
        %827 = vmatpush1.bf16.msra.mxu0 0
        %828 = vmatprep.subr.bf16.mxu0 0
        %829 = vmatpush1.bf16.msra.mxu0 0
        %830 = vmatprep.subr.bf16.mxu0 0
        %831 = vmatpush1.bf16.msra.mxu0 0
        %832 = vmatprep.mubr.bf16.mxu0 0
        %833 = vmatmul.mubr.bf16.gmra.mrb[0].mxu0 %v786
        %v834 = vpop.f32.mrb[0].mxu0
        %v835 = vadd.f32 0.0, %v834
        %v836 = vpop.f32.mrb[0].mxu0
        %v837 = vadd.f32 0.0, %v836
        %v838 = vpop.f32.mrb[0].mxu0
        %v839 = vadd.f32 0.0, %v838
        %v840 = vpop.f32.mrb[0].mxu0
        %v841 = vadd.f32 0.0, %v840
        %842 = vmatprep.mubr.bf16.mxu0 0
        %843 = vmatmul.mubr.bf16.gmra.mrb[0].mxu0 %v789
        %v844 = vpop.f32.mrb[0].mxu0
        %v845 = vadd.f32 0.0, %v844
        %v846 = vpop.f32.mrb[0].mxu0
        %v847 = vadd.f32 0.0, %v846
        %v848 = vpop.f32.mrb[0].mxu0
        %v849 = vadd.f32 0.0, %v848
        %v850 = vpop.f32.mrb[0].mxu0
        %v851 = vadd.f32 0.0, %v850
        %852 = vdwg.mxu0
        %853 = vmatprep.subr.bf16.mxu0 0
        %854 = vmatpush1.bf16.msra.mxu0 %v798
        %855 = vmatprep.subr.bf16.mxu0 0
        %856 = vmatpush1.bf16.msra.mxu0 0
        %857 = vmatprep.subr.bf16.mxu0 0
        %858 = vmatpush1.bf16.msra.mxu0 0
        %859 = vmatprep.subr.bf16.mxu0 0
        %860 = vmatpush1.bf16.msra.mxu0 0
        %861 = vmatprep.subr.bf16.mxu0 0
        %862 = vmatpush1.bf16.msra.mxu0 0
        %863 = vmatprep.subr.bf16.mxu0 0
        %864 = vmatpush1.bf16.msra.mxu0 0
        %865 = vmatprep.subr.bf16.mxu0 0
        %866 = vmatpush1.bf16.msra.mxu0 0
        %867 = vmatprep.subr.bf16.mxu0 0
        %868 = vmatpush1.bf16.msra.mxu0 0
        %869 = vmatprep.subr.bf16.mxu0 0
        %870 = vmatpush1.bf16.msra.mxu0 0
        %871 = vmatprep.subr.bf16.mxu0 0
        %872 = vmatpush1.bf16.msra.mxu0 0
        %873 = vmatprep.subr.bf16.mxu0 0
        %874 = vmatpush1.bf16.msra.mxu0 0
        %875 = vmatprep.subr.bf16.mxu0 0
        %876 = vmatpush1.bf16.msra.mxu0 0
        %877 = vmatprep.subr.bf16.mxu0 0
        %878 = vmatpush1.bf16.msra.mxu0 0
        %879 = vmatprep.subr.bf16.mxu0 0
        %880 = vmatpush1.bf16.msra.mxu0 0
        %881 = vmatprep.subr.bf16.mxu0 0
        %882 = vmatpush1.bf16.msra.mxu0 0
        %883 = vmatprep.subr.bf16.mxu0 0
        %884 = vmatpush1.bf16.msra.mxu0 0
        %885 = vmatprep.mubr.bf16.mxu0 0
        %886 = vmatmul.mubr.bf16.gmra.mrb[0].mxu0 %v786
        %v887 = vpop.f32.mrb[0].mxu0
        %v888 = vadd.f32 0.0, %v887
        %v889 = vpop.f32.mrb[0].mxu0
        %v890 = vpop.f32.mrb[0].mxu0
        %v891 = vadd.f32 0.0, %v890
        %v892 = vpop.f32.mrb[0].mxu0
        %893 = vmatprep.mubr.bf16.mxu0 0
        %894 = vmatmul.mubr.bf16.gmra.mrb[0].mxu0 %v789
        %v895 = vpop.f32.mrb[0].mxu0
        %v896 = vadd.f32 0.0, %v895
        %v897 = vpop.f32.mrb[0].mxu0
        %v898 = vpop.f32.mrb[0].mxu0
        %v899 = vadd.f32 0.0, %v898
        %v900 = vpop.f32.mrb[0].mxu0
        %901 = vdwg.mxu0
        %v902 = vadd.f32 %v727, %v835
        %v903 = vadd.f32 %v728, %v837
        %v904 = vadd.f32 %v729, %v888
        %v905 = vadd.f32 %v730, %v839
        %v906 = vadd.f32 %v731, %v841
        %v907 = vadd.f32 %v732, %v891
        %v908 = vadd.f32 %v733, %v845
        %v909 = vadd.f32 %v734, %v847
        %v910 = vadd.f32 %v735, %v896
        %v911 = vadd.f32 %v736, %v849
        %v912 = vadd.f32 %v737, %v851
        %v913 = vadd.f32 %v738, %v899
        %v914 = vld [vmem:[%s222] sm:$0xff]
        %s915 = scalar_lea.vmem %s1, 64
        %v916 = vld [vmem:[%s915] sm:$0xf]
        %v917 = vld [vmem:[%s915 + $0x4] sm:$0xf]
        %v918 = vld [vmem:[%s915 + $0x8] sm:$0xf]
        %v919 = vld [vmem:[%s915 + $0xc] sm:$0xf]
        %v924 = vunpack.c.l.b16 %v916
        %v925 = vunpack.c.l.b16 %v917
        %v926 = vunpack.c.l.b16 %v918
        %v927 = vunpack.c.l.b16 %v919
        %v928 = vpack.c.b16 %v925, %v924
        %v929 = vpack.c.b16 %v927, %v926
        %v931 = vcombine.high %v914, %v914
        %v933 = vunpack.c.l.s4 1983009808
        %v934 = vunpack.c.0.s8 %v933
        %v935 = vlaneseq
        %v936 = vshrl.u32 %v935, 7
        %v937 = vsub.s32 %v934, %v936
        %v938 = vrot.slane %v914, %v937
        %v940 = vunpack.c.l.s4 1983009808
        %v941 = vunpack.c.0.s8 %v940
        %v942 = vlaneseq
        %v943 = vshrl.u32 %v942, 7
        %v944 = vsub.s32 %v941, %v943
        %v945 = vrot.slane %v931, %v944
        %v946 = vcombine.high %v938, %v938
        %v947 = vcombine.high %v945, %v945
        %948 = vrot.lane.b32.xlu0 %v938, 109
        %v949 = vpop.permute.xlu0 %948
        %950 = vrot.lane.b32.xlu0 %v946, 109
        %v951 = vpop.permute.xlu0 %950
        %952 = vrot.lane.b32.xlu0 %v945, 109
        %v953 = vpop.permute.xlu0 %952
        %954 = vrot.lane.b32.xlu0 %v947, 109
        %v955 = vpop.permute.xlu0 %954
        %vm956 = vcmask 891904
        %v957 = vsel %vm956, %v949, %v951
        %v958 = vsel %vm956, %v951, %v953
        %v959 = vsel %vm956, %v953, %v955
        %v961 = vsel %vm301, %v928, 0
        %v964 = vsel %vm301, %v929, 0
        %v967 = vsel %vm308, %v957, 0
        %v970 = vsel %vm308, %v958, 0
        %v973 = vsel %vm308, %v959, 0
        %975 = vmatprep.subr.bf16.mxu0 %v970
        %976 = vmatpush1.bf16.msra.mxu0 %v967
        %977 = vmatprep.subr.bf16.mxu0 0
        %978 = vmatpush1.bf16.msra.mxu0 0
        %979 = vmatprep.subr.bf16.mxu0 0
        %980 = vmatpush1.bf16.msra.mxu0 0
        %981 = vmatprep.subr.bf16.mxu0 0
        %982 = vmatpush1.bf16.msra.mxu0 0
        %983 = vmatprep.subr.bf16.mxu0 0
        %984 = vmatpush1.bf16.msra.mxu0 0
        %985 = vmatprep.subr.bf16.mxu0 0
        %986 = vmatpush1.bf16.msra.mxu0 0
        %987 = vmatprep.subr.bf16.mxu0 0
        %988 = vmatpush1.bf16.msra.mxu0 0
        %989 = vmatprep.subr.bf16.mxu0 0
        %990 = vmatpush1.bf16.msra.mxu0 0
        %991 = vmatprep.subr.bf16.mxu0 0
        %992 = vmatpush1.bf16.msra.mxu0 0
        %993 = vmatprep.subr.bf16.mxu0 0
        %994 = vmatpush1.bf16.msra.mxu0 0
        %995 = vmatprep.subr.bf16.mxu0 0
        %996 = vmatpush1.bf16.msra.mxu0 0
        %997 = vmatprep.subr.bf16.mxu0 0
        %998 = vmatpush1.bf16.msra.mxu0 0
        %999 = vmatprep.subr.bf16.mxu0 0
        %1000 = vmatpush1.bf16.msra.mxu0 0
        %1001 = vmatprep.subr.bf16.mxu0 0
        %1002 = vmatpush1.bf16.msra.mxu0 0
        %1003 = vmatprep.subr.bf16.mxu0 0
        %1004 = vmatpush1.bf16.msra.mxu0 0
        %1005 = vmatprep.subr.bf16.mxu0 0
        %1006 = vmatpush1.bf16.msra.mxu0 0
        %1007 = vmatprep.mubr.bf16.mxu0 0
        %1008 = vmatmul.mubr.bf16.gmra.mrb[0].mxu0 %v961
        %v1009 = vpop.f32.mrb[0].mxu0
        %v1010 = vadd.f32 0.0, %v1009
        %v1011 = vpop.f32.mrb[0].mxu0
        %v1012 = vadd.f32 0.0, %v1011
        %v1013 = vpop.f32.mrb[0].mxu0
        %v1014 = vadd.f32 0.0, %v1013
        %v1015 = vpop.f32.mrb[0].mxu0
        %v1016 = vadd.f32 0.0, %v1015
        %1017 = vmatprep.mubr.bf16.mxu0 0
        %1018 = vmatmul.mubr.bf16.gmra.mrb[0].mxu0 %v964
        %v1019 = vpop.f32.mrb[0].mxu0
        %v1020 = vadd.f32 0.0, %v1019
        %v1021 = vpop.f32.mrb[0].mxu0
        %v1022 = vadd.f32 0.0, %v1021
        %v1023 = vpop.f32.mrb[0].mxu0
        %v1024 = vadd.f32 0.0, %v1023
        %v1025 = vpop.f32.mrb[0].mxu0
        %v1026 = vadd.f32 0.0, %v1025
        %1027 = vdwg.mxu0
        %1028 = vmatprep.subr.bf16.mxu0 0
        %1029 = vmatpush1.bf16.msra.mxu0 %v973
        %1030 = vmatprep.subr.bf16.mxu0 0
        %1031 = vmatpush1.bf16.msra.mxu0 0
        %1032 = vmatprep.subr.bf16.mxu0 0
        %1033 = vmatpush1.bf16.msra.mxu0 0
        %1034 = vmatprep.subr.bf16.mxu0 0
        %1035 = vmatpush1.bf16.msra.mxu0 0
        %1036 = vmatprep.subr.bf16.mxu0 0
        %1037 = vmatpush1.bf16.msra.mxu0 0
        %1038 = vmatprep.subr.bf16.mxu0 0
        %1039 = vmatpush1.bf16.msra.mxu0 0
        %1040 = vmatprep.subr.bf16.mxu0 0
        %1041 = vmatpush1.bf16.msra.mxu0 0
        %1042 = vmatprep.subr.bf16.mxu0 0
        %1043 = vmatpush1.bf16.msra.mxu0 0
        %1044 = vmatprep.subr.bf16.mxu0 0
        %1045 = vmatpush1.bf16.msra.mxu0 0
        %1046 = vmatprep.subr.bf16.mxu0 0
        %1047 = vmatpush1.bf16.msra.mxu0 0
        %1048 = vmatprep.subr.bf16.mxu0 0
        %1049 = vmatpush1.bf16.msra.mxu0 0
        %1050 = vmatprep.subr.bf16.mxu0 0
        %1051 = vmatpush1.bf16.msra.mxu0 0
        %1052 = vmatprep.subr.bf16.mxu0 0
        %1053 = vmatpush1.bf16.msra.mxu0 0
        %1054 = vmatprep.subr.bf16.mxu0 0
        %1055 = vmatpush1.bf16.msra.mxu0 0
        %1056 = vmatprep.subr.bf16.mxu0 0
        %1057 = vmatpush1.bf16.msra.mxu0 0
        %1058 = vmatprep.subr.bf16.mxu0 0
        %1059 = vmatpush1.bf16.msra.mxu0 0
        %1060 = vmatprep.mubr.bf16.mxu0 0
        %1061 = vmatmul.mubr.bf16.gmra.mrb[0].mxu0 %v961
        %v1062 = vpop.f32.mrb[0].mxu0
        %v1063 = vadd.f32 0.0, %v1062
        %v1064 = vpop.f32.mrb[0].mxu0
        %v1065 = vpop.f32.mrb[0].mxu0
        %v1066 = vadd.f32 0.0, %v1065
        %v1067 = vpop.f32.mrb[0].mxu0
        %1068 = vmatprep.mubr.bf16.mxu0 0
        %1069 = vmatmul.mubr.bf16.gmra.mrb[0].mxu0 %v964
        %v1070 = vpop.f32.mrb[0].mxu0
        %v1071 = vadd.f32 0.0, %v1070
        %v1072 = vpop.f32.mrb[0].mxu0
        %v1073 = vpop.f32.mrb[0].mxu0
        %v1074 = vadd.f32 0.0, %v1073
        %v1075 = vpop.f32.mrb[0].mxu0
        %1076 = vdwg.mxu0
        %v1077 = vadd.f32 %v902, %v1010
        %v1078 = vadd.f32 %v903, %v1012
        %v1079 = vadd.f32 %v904, %v1063
        %v1080 = vadd.f32 %v905, %v1014
        %v1081 = vadd.f32 %v906, %v1016
        %v1082 = vadd.f32 %v907, %v1066
        %v1083 = vadd.f32 %v908, %v1020
        %v1084 = vadd.f32 %v909, %v1022
        %v1085 = vadd.f32 %v910, %v1071
        %v1086 = vadd.f32 %v911, %v1024
        %v1087 = vadd.f32 %v912, %v1026
        %v1088 = vadd.f32 %v913, %v1074
        %v1089 = vld [vmem:[%s222] sm:$0xff]
        %s1090 = scalar_lea.vmem %s1, 80
        %v1091 = vld [vmem:[%s1090] sm:$0xf]
        %v1092 = vld [vmem:[%s1090 + $0x4] sm:$0xf]
        %v1093 = vld [vmem:[%s1090 + $0x8] sm:$0xf]
        %v1094 = vld [vmem:[%s1090 + $0xc] sm:$0xf]
        %v1099 = vunpack.c.l.b16 %v1091
        %v1100 = vunpack.c.l.b16 %v1092
        %v1101 = vunpack.c.l.b16 %v1093
        %v1102 = vunpack.c.l.b16 %v1094
        %v1103 = vpack.c.b16 %v1100, %v1099
        %v1104 = vpack.c.b16 %v1102, %v1101
        %v1106 = vcombine.high %v1089, %v1089
        %v1108 = vunpack.c.l.s4 1983009808
        %v1109 = vunpack.c.0.s8 %v1108
        %v1110 = vlaneseq
        %v1111 = vshrl.u32 %v1110, 7
        %v1112 = vsub.s32 %v1109, %v1111
        %v1113 = vrot.slane %v1089, %v1112
        %v1115 = vunpack.c.l.s4 1983009808
        %v1116 = vunpack.c.0.s8 %v1115
        %v1117 = vlaneseq
        %v1118 = vshrl.u32 %v1117, 7
        %v1119 = vsub.s32 %v1116, %v1118
        %v1120 = vrot.slane %v1106, %v1119
        %v1121 = vcombine.high %v1113, %v1113
        %v1122 = vcombine.high %v1120, %v1120
        %1123 = vrot.lane.b32.xlu0 %v1113, 108
        %v1124 = vpop.permute.xlu0 %1123
        %1125 = vrot.lane.b32.xlu0 %v1121, 108
        %v1126 = vpop.permute.xlu0 %1125
        %1127 = vrot.lane.b32.xlu0 %v1120, 108
        %v1128 = vpop.permute.xlu0 %1127
        %1129 = vrot.lane.b32.xlu0 %v1122, 108
        %v1130 = vpop.permute.xlu0 %1129
        %vm1131 = vcmask 883712
        %v1132 = vsel %vm1131, %v1124, %v1126
        %v1133 = vsel %vm1131, %v1126, %v1128
        %v1134 = vsel %vm1131, %v1128, %v1130
        %v1136 = vsel %vm301, %v1103, 0
        %v1139 = vsel %vm301, %v1104, 0
        %v1142 = vsel %vm308, %v1132, 0
        %v1145 = vsel %vm308, %v1133, 0
        %v1148 = vsel %vm308, %v1134, 0
        %1150 = vmatprep.subr.bf16.mxu0 %v1145
        %1151 = vmatpush1.bf16.msra.mxu0 %v1142
        %1152 = vmatprep.subr.bf16.mxu0 0
        %1153 = vmatpush1.bf16.msra.mxu0 0
        %1154 = vmatprep.subr.bf16.mxu0 0
        %1155 = vmatpush1.bf16.msra.mxu0 0
        %1156 = vmatprep.subr.bf16.mxu0 0
        %1157 = vmatpush1.bf16.msra.mxu0 0
        %1158 = vmatprep.subr.bf16.mxu0 0
        %1159 = vmatpush1.bf16.msra.mxu0 0
        %1160 = vmatprep.subr.bf16.mxu0 0
        %1161 = vmatpush1.bf16.msra.mxu0 0
        %1162 = vmatprep.subr.bf16.mxu0 0
        %1163 = vmatpush1.bf16.msra.mxu0 0
        %1164 = vmatprep.subr.bf16.mxu0 0
        %1165 = vmatpush1.bf16.msra.mxu0 0
        %1166 = vmatprep.subr.bf16.mxu0 0
        %1167 = vmatpush1.bf16.msra.mxu0 0
        %1168 = vmatprep.subr.bf16.mxu0 0
        %1169 = vmatpush1.bf16.msra.mxu0 0
        %1170 = vmatprep.subr.bf16.mxu0 0
        %1171 = vmatpush1.bf16.msra.mxu0 0
        %1172 = vmatprep.subr.bf16.mxu0 0
        %1173 = vmatpush1.bf16.msra.mxu0 0
        %1174 = vmatprep.subr.bf16.mxu0 0
        %1175 = vmatpush1.bf16.msra.mxu0 0
        %1176 = vmatprep.subr.bf16.mxu0 0
        %1177 = vmatpush1.bf16.msra.mxu0 0
        %1178 = vmatprep.subr.bf16.mxu0 0
        %1179 = vmatpush1.bf16.msra.mxu0 0
        %1180 = vmatprep.subr.bf16.mxu0 0
        %1181 = vmatpush1.bf16.msra.mxu0 0
        %1182 = vmatprep.mubr.bf16.mxu0 0
        %1183 = vmatmul.mubr.bf16.gmra.mrb[0].mxu0 %v1136
        %v1184 = vpop.f32.mrb[0].mxu0
        %v1185 = vadd.f32 0.0, %v1184
        %v1186 = vpop.f32.mrb[0].mxu0
        %v1187 = vadd.f32 0.0, %v1186
        %v1188 = vpop.f32.mrb[0].mxu0
        %v1189 = vadd.f32 0.0, %v1188
        %v1190 = vpop.f32.mrb[0].mxu0
        %v1191 = vadd.f32 0.0, %v1190
        %1192 = vmatprep.mubr.bf16.mxu0 0
        %1193 = vmatmul.mubr.bf16.gmra.mrb[0].mxu0 %v1139
        %v1194 = vpop.f32.mrb[0].mxu0
        %v1195 = vadd.f32 0.0, %v1194
        %v1196 = vpop.f32.mrb[0].mxu0
        %v1197 = vadd.f32 0.0, %v1196
        %v1198 = vpop.f32.mrb[0].mxu0
        %v1199 = vadd.f32 0.0, %v1198
        %v1200 = vpop.f32.mrb[0].mxu0
        %v1201 = vadd.f32 0.0, %v1200
        %1202 = vdwg.mxu0
        %1203 = vmatprep.subr.bf16.mxu0 0
        %1204 = vmatpush1.bf16.msra.mxu0 %v1148
        %1205 = vmatprep.subr.bf16.mxu0 0
        %1206 = vmatpush1.bf16.msra.mxu0 0
        %1207 = vmatprep.subr.bf16.mxu0 0
        %1208 = vmatpush1.bf16.msra.mxu0 0
        %1209 = vmatprep.subr.bf16.mxu0 0
        %1210 = vmatpush1.bf16.msra.mxu0 0
        %1211 = vmatprep.subr.bf16.mxu0 0
        %1212 = vmatpush1.bf16.msra.mxu0 0
        %1213 = vmatprep.subr.bf16.mxu0 0
        %1214 = vmatpush1.bf16.msra.mxu0 0
        %1215 = vmatprep.subr.bf16.mxu0 0
        %1216 = vmatpush1.bf16.msra.mxu0 0
        %1217 = vmatprep.subr.bf16.mxu0 0
        %1218 = vmatpush1.bf16.msra.mxu0 0
        %1219 = vmatprep.subr.bf16.mxu0 0
        %1220 = vmatpush1.bf16.msra.mxu0 0
        %1221 = vmatprep.subr.bf16.mxu0 0
        %1222 = vmatpush1.bf16.msra.mxu0 0
        %1223 = vmatprep.subr.bf16.mxu0 0
        %1224 = vmatpush1.bf16.msra.mxu0 0
        %1225 = vmatprep.subr.bf16.mxu0 0
        %1226 = vmatpush1.bf16.msra.mxu0 0
        %1227 = vmatprep.subr.bf16.mxu0 0
        %1228 = vmatpush1.bf16.msra.mxu0 0
        %1229 = vmatprep.subr.bf16.mxu0 0
        %1230 = vmatpush1.bf16.msra.mxu0 0
        %1231 = vmatprep.subr.bf16.mxu0 0
        %1232 = vmatpush1.bf16.msra.mxu0 0
        %1233 = vmatprep.subr.bf16.mxu0 0
        %1234 = vmatpush1.bf16.msra.mxu0 0
        %1235 = vmatprep.mubr.bf16.mxu0 0
        %1236 = vmatmul.mubr.bf16.gmra.mrb[0].mxu0 %v1136
        %v1237 = vpop.f32.mrb[0].mxu0
        %v1238 = vadd.f32 0.0, %v1237
        %v1239 = vpop.f32.mrb[0].mxu0
        %v1240 = vpop.f32.mrb[0].mxu0
        %v1241 = vadd.f32 0.0, %v1240
        %v1242 = vpop.f32.mrb[0].mxu0
        %1243 = vmatprep.mubr.bf16.mxu0 0
        %1244 = vmatmul.mubr.bf16.gmra.mrb[0].mxu0 %v1139
        %v1245 = vpop.f32.mrb[0].mxu0
        %v1246 = vadd.f32 0.0, %v1245
        %v1247 = vpop.f32.mrb[0].mxu0
        %v1248 = vpop.f32.mrb[0].mxu0
        %v1249 = vadd.f32 0.0, %v1248
        %v1250 = vpop.f32.mrb[0].mxu0
        %1251 = vdwg.mxu0
        %v1252 = vadd.f32 %v1077, %v1185
        %v1253 = vadd.f32 %v1078, %v1187
        %v1254 = vadd.f32 %v1079, %v1238
        %v1255 = vadd.f32 %v1080, %v1189
        %v1256 = vadd.f32 %v1081, %v1191
        %v1257 = vadd.f32 %v1082, %v1241
        %v1258 = vadd.f32 %v1083, %v1195
        %v1259 = vadd.f32 %v1084, %v1197
        %v1260 = vadd.f32 %v1085, %v1246
        %v1261 = vadd.f32 %v1086, %v1199
        %v1262 = vadd.f32 %v1087, %v1201
        %v1263 = vadd.f32 %v1088, %v1249
        %v1264 = vld [vmem:[%s222] sm:$0xff]
        %s1265 = scalar_lea.vmem %s1, 96
        %v1266 = vld [vmem:[%s1265] sm:$0xf]
        %v1267 = vld [vmem:[%s1265 + $0x4] sm:$0xf]
        %v1268 = vld [vmem:[%s1265 + $0x8] sm:$0xf]
        %v1269 = vld [vmem:[%s1265 + $0xc] sm:$0xf]
        %v1274 = vunpack.c.l.b16 %v1266
        %v1275 = vunpack.c.l.b16 %v1267
        %v1276 = vunpack.c.l.b16 %v1268
        %v1277 = vunpack.c.l.b16 %v1269
        %v1278 = vpack.c.b16 %v1275, %v1274
        %v1279 = vpack.c.b16 %v1277, %v1276
        %v1281 = vcombine.high %v1264, %v1264
        %v1283 = vunpack.c.l.s4 1983009808
        %v1284 = vunpack.c.0.s8 %v1283
        %v1285 = vlaneseq
        %v1286 = vshrl.u32 %v1285, 7
        %v1287 = vsub.s32 %v1284, %v1286
        %v1288 = vrot.slane %v1264, %v1287
        %v1290 = vunpack.c.l.s4 1983009808
        %v1291 = vunpack.c.0.s8 %v1290
        %v1292 = vlaneseq
        %v1293 = vshrl.u32 %v1292, 7
        %v1294 = vsub.s32 %v1291, %v1293
        %v1295 = vrot.slane %v1281, %v1294
        %v1296 = vcombine.high %v1288, %v1288
        %v1297 = vcombine.high %v1295, %v1295
        %1298 = vrot.lane.b32.xlu0 %v1288, 92
        %v1299 = vpop.permute.xlu0 %1298
        %1300 = vrot.lane.b32.xlu0 %v1296, 92
        %v1301 = vpop.permute.xlu0 %1300
        %1302 = vrot.lane.b32.xlu0 %v1295, 92
        %v1303 = vpop.permute.xlu0 %1302
        %1304 = vrot.lane.b32.xlu0 %v1297, 92
        %v1305 = vpop.permute.xlu0 %1304
        %vm1306 = vcmask 752640
        %v1307 = vsel %vm1306, %v1299, %v1301
        %v1308 = vsel %vm1306, %v1301, %v1303
        %v1309 = vsel %vm1306, %v1303, %v1305
        %v1311 = vsel %vm301, %v1278, 0
        %v1314 = vsel %vm301, %v1279, 0
        %v1317 = vsel %vm308, %v1307, 0
        %v1320 = vsel %vm308, %v1308, 0
        %v1323 = vsel %vm308, %v1309, 0
        %1325 = vmatprep.subr.bf16.mxu0 %v1320
        %1326 = vmatpush1.bf16.msra.mxu0 %v1317
        %1327 = vmatprep.subr.bf16.mxu0 0
        %1328 = vmatpush1.bf16.msra.mxu0 0
        %1329 = vmatprep.subr.bf16.mxu0 0
        %1330 = vmatpush1.bf16.msra.mxu0 0
        %1331 = vmatprep.subr.bf16.mxu0 0
        %1332 = vmatpush1.bf16.msra.mxu0 0
        %1333 = vmatprep.subr.bf16.mxu0 0
        %1334 = vmatpush1.bf16.msra.mxu0 0
        %1335 = vmatprep.subr.bf16.mxu0 0
        %1336 = vmatpush1.bf16.msra.mxu0 0
        %1337 = vmatprep.subr.bf16.mxu0 0
        %1338 = vmatpush1.bf16.msra.mxu0 0
        %1339 = vmatprep.subr.bf16.mxu0 0
        %1340 = vmatpush1.bf16.msra.mxu0 0
        %1341 = vmatprep.subr.bf16.mxu0 0
        %1342 = vmatpush1.bf16.msra.mxu0 0
        %1343 = vmatprep.subr.bf16.mxu0 0
        %1344 = vmatpush1.bf16.msra.mxu0 0
        %1345 = vmatprep.subr.bf16.mxu0 0
        %1346 = vmatpush1.bf16.msra.mxu0 0
        %1347 = vmatprep.subr.bf16.mxu0 0
        %1348 = vmatpush1.bf16.msra.mxu0 0
        %1349 = vmatprep.subr.bf16.mxu0 0
        %1350 = vmatpush1.bf16.msra.mxu0 0
        %1351 = vmatprep.subr.bf16.mxu0 0
        %1352 = vmatpush1.bf16.msra.mxu0 0
        %1353 = vmatprep.subr.bf16.mxu0 0
        %1354 = vmatpush1.bf16.msra.mxu0 0
        %1355 = vmatprep.subr.bf16.mxu0 0
        %1356 = vmatpush1.bf16.msra.mxu0 0
        %1357 = vmatprep.mubr.bf16.mxu0 0
        %1358 = vmatmul.mubr.bf16.gmra.mrb[0].mxu0 %v1311
        %v1359 = vpop.f32.mrb[0].mxu0
        %v1360 = vadd.f32 0.0, %v1359
        %v1361 = vpop.f32.mrb[0].mxu0
        %v1362 = vadd.f32 0.0, %v1361
        %v1363 = vpop.f32.mrb[0].mxu0
        %v1364 = vadd.f32 0.0, %v1363
        %v1365 = vpop.f32.mrb[0].mxu0
        %v1366 = vadd.f32 0.0, %v1365
        %1367 = vmatprep.mubr.bf16.mxu0 0
        %1368 = vmatmul.mubr.bf16.gmra.mrb[0].mxu0 %v1314
        %v1369 = vpop.f32.mrb[0].mxu0
        %v1370 = vadd.f32 0.0, %v1369
        %v1371 = vpop.f32.mrb[0].mxu0
        %v1372 = vadd.f32 0.0, %v1371
        %v1373 = vpop.f32.mrb[0].mxu0
        %v1374 = vadd.f32 0.0, %v1373
        %v1375 = vpop.f32.mrb[0].mxu0
        %v1376 = vadd.f32 0.0, %v1375
        %1377 = vdwg.mxu0
        %1378 = vmatprep.subr.bf16.mxu0 0
        %1379 = vmatpush1.bf16.msra.mxu0 %v1323
        %1380 = vmatprep.subr.bf16.mxu0 0
        %1381 = vmatpush1.bf16.msra.mxu0 0
        %1382 = vmatprep.subr.bf16.mxu0 0
        %1383 = vmatpush1.bf16.msra.mxu0 0
        %1384 = vmatprep.subr.bf16.mxu0 0
        %1385 = vmatpush1.bf16.msra.mxu0 0
        %1386 = vmatprep.subr.bf16.mxu0 0
        %1387 = vmatpush1.bf16.msra.mxu0 0
        %1388 = vmatprep.subr.bf16.mxu0 0
        %1389 = vmatpush1.bf16.msra.mxu0 0
        %1390 = vmatprep.subr.bf16.mxu0 0
        %1391 = vmatpush1.bf16.msra.mxu0 0
        %1392 = vmatprep.subr.bf16.mxu0 0
        %1393 = vmatpush1.bf16.msra.mxu0 0
        %1394 = vmatprep.subr.bf16.mxu0 0
        %1395 = vmatpush1.bf16.msra.mxu0 0
        %1396 = vmatprep.subr.bf16.mxu0 0
        %1397 = vmatpush1.bf16.msra.mxu0 0
        %1398 = vmatprep.subr.bf16.mxu0 0
        %1399 = vmatpush1.bf16.msra.mxu0 0
        %1400 = vmatprep.subr.bf16.mxu0 0
        %1401 = vmatpush1.bf16.msra.mxu0 0
        %1402 = vmatprep.subr.bf16.mxu0 0
        %1403 = vmatpush1.bf16.msra.mxu0 0
        %1404 = vmatprep.subr.bf16.mxu0 0
        %1405 = vmatpush1.bf16.msra.mxu0 0
        %1406 = vmatprep.subr.bf16.mxu0 0
        %1407 = vmatpush1.bf16.msra.mxu0 0
        %1408 = vmatprep.subr.bf16.mxu0 0
        %1409 = vmatpush1.bf16.msra.mxu0 0
        %1410 = vmatprep.mubr.bf16.mxu0 0
        %1411 = vmatmul.mubr.bf16.gmra.mrb[0].mxu0 %v1311
        %v1412 = vpop.f32.mrb[0].mxu0
        %v1413 = vadd.f32 0.0, %v1412
        %v1414 = vpop.f32.mrb[0].mxu0
        %v1415 = vpop.f32.mrb[0].mxu0
        %v1416 = vadd.f32 0.0, %v1415
        %v1417 = vpop.f32.mrb[0].mxu0
        %1418 = vmatprep.mubr.bf16.mxu0 0
        %1419 = vmatmul.mubr.bf16.gmra.mrb[0].mxu0 %v1314
        %v1420 = vpop.f32.mrb[0].mxu0
        %v1421 = vadd.f32 0.0, %v1420
        %v1422 = vpop.f32.mrb[0].mxu0
        %v1423 = vpop.f32.mrb[0].mxu0
        %v1424 = vadd.f32 0.0, %v1423
        %v1425 = vpop.f32.mrb[0].mxu0
        %1426 = vdwg.mxu0
        %v1427 = vadd.f32 %v1252, %v1360
        %v1428 = vadd.f32 %v1253, %v1362
        %v1429 = vadd.f32 %v1254, %v1413
        %v1430 = vadd.f32 %v1255, %v1364
        %v1431 = vadd.f32 %v1256, %v1366
        %v1432 = vadd.f32 %v1257, %v1416
        %v1433 = vadd.f32 %v1258, %v1370
        %v1434 = vadd.f32 %v1259, %v1372
        %v1435 = vadd.f32 %v1260, %v1421
        %v1436 = vadd.f32 %v1261, %v1374
        %v1437 = vadd.f32 %v1262, %v1376
        %v1438 = vadd.f32 %v1263, %v1424
        %v1439 = vld [vmem:[%s222] sm:$0xff]
        %s1440 = scalar_lea.vmem %s1, 112
        %v1441 = vld [vmem:[%s1440] sm:$0xf]
        %v1442 = vld [vmem:[%s1440 + $0x4] sm:$0xf]
        %v1443 = vld [vmem:[%s1440 + $0x8] sm:$0xf]
        %v1444 = vld [vmem:[%s1440 + $0xc] sm:$0xf]
        %v1449 = vunpack.c.l.b16 %v1441
        %v1450 = vunpack.c.l.b16 %v1442
        %v1451 = vunpack.c.l.b16 %v1443
        %v1452 = vunpack.c.l.b16 %v1444
        %v1453 = vpack.c.b16 %v1450, %v1449
        %v1454 = vpack.c.b16 %v1452, %v1451
        %v1456 = vcombine.high %v1439, %v1439
        %v1458 = vunpack.c.l.s4 1983009808
        %v1459 = vunpack.c.0.s8 %v1458
        %v1460 = vlaneseq
        %v1461 = vshrl.u32 %v1460, 7
        %v1462 = vsub.s32 %v1459, %v1461
        %v1463 = vrot.slane %v1439, %v1462
        %v1465 = vunpack.c.l.s4 1983009808
        %v1466 = vunpack.c.0.s8 %v1465
        %v1467 = vlaneseq
        %v1468 = vshrl.u32 %v1467, 7
        %v1469 = vsub.s32 %v1466, %v1468
        %v1470 = vrot.slane %v1456, %v1469
        %v1471 = vcombine.high %v1463, %v1463
        %v1472 = vcombine.high %v1470, %v1470
        %1473 = vrot.lane.b32.xlu0 %v1463, 91
        %v1474 = vpop.permute.xlu0 %1473
        %1475 = vrot.lane.b32.xlu0 %v1471, 91
        %v1476 = vpop.permute.xlu0 %1475
        %1477 = vrot.lane.b32.xlu0 %v1470, 91
        %v1478 = vpop.permute.xlu0 %1477
        %1479 = vrot.lane.b32.xlu0 %v1472, 91
        %v1480 = vpop.permute.xlu0 %1479
        %vm1481 = vcmask 744448
        %v1482 = vsel %vm1481, %v1474, %v1476
        %v1483 = vsel %vm1481, %v1476, %v1478
        %v1484 = vsel %vm1481, %v1478, %v1480
        %v1486 = vsel %vm301, %v1453, 0
        %v1489 = vsel %vm301, %v1454, 0
        %v1492 = vsel %vm308, %v1482, 0
        %v1495 = vsel %vm308, %v1483, 0
        %v1498 = vsel %vm308, %v1484, 0
        %1500 = vmatprep.subr.bf16.mxu0 %v1495
        %1501 = vmatpush1.bf16.msra.mxu0 %v1492
        %1502 = vmatprep.subr.bf16.mxu0 0
        %1503 = vmatpush1.bf16.msra.mxu0 0
        %1504 = vmatprep.subr.bf16.mxu0 0
        %1505 = vmatpush1.bf16.msra.mxu0 0
        %1506 = vmatprep.subr.bf16.mxu0 0
        %1507 = vmatpush1.bf16.msra.mxu0 0
        %1508 = vmatprep.subr.bf16.mxu0 0
        %1509 = vmatpush1.bf16.msra.mxu0 0
        %1510 = vmatprep.subr.bf16.mxu0 0
        %1511 = vmatpush1.bf16.msra.mxu0 0
        %1512 = vmatprep.subr.bf16.mxu0 0
        %1513 = vmatpush1.bf16.msra.mxu0 0
        %1514 = vmatprep.subr.bf16.mxu0 0
        %1515 = vmatpush1.bf16.msra.mxu0 0
        %1516 = vmatprep.subr.bf16.mxu0 0
        %1517 = vmatpush1.bf16.msra.mxu0 0
        %1518 = vmatprep.subr.bf16.mxu0 0
        %1519 = vmatpush1.bf16.msra.mxu0 0
        %1520 = vmatprep.subr.bf16.mxu0 0
        %1521 = vmatpush1.bf16.msra.mxu0 0
        %1522 = vmatprep.subr.bf16.mxu0 0
        %1523 = vmatpush1.bf16.msra.mxu0 0
        %1524 = vmatprep.subr.bf16.mxu0 0
        %1525 = vmatpush1.bf16.msra.mxu0 0
        %1526 = vmatprep.subr.bf16.mxu0 0
        %1527 = vmatpush1.bf16.msra.mxu0 0
        %1528 = vmatprep.subr.bf16.mxu0 0
        %1529 = vmatpush1.bf16.msra.mxu0 0
        %1530 = vmatprep.subr.bf16.mxu0 0
        %1531 = vmatpush1.bf16.msra.mxu0 0
        %1532 = vmatprep.mubr.bf16.mxu0 0
        %1533 = vmatmul.mubr.bf16.gmra.mrb[0].mxu0 %v1486
        %v1534 = vpop.f32.mrb[0].mxu0
        %v1535 = vadd.f32 0.0, %v1534
        %v1536 = vpop.f32.mrb[0].mxu0
        %v1537 = vadd.f32 0.0, %v1536
        %v1538 = vpop.f32.mrb[0].mxu0
        %v1539 = vadd.f32 0.0, %v1538
        %v1540 = vpop.f32.mrb[0].mxu0
        %v1541 = vadd.f32 0.0, %v1540
        %1542 = vmatprep.mubr.bf16.mxu0 0
        %1543 = vmatmul.mubr.bf16.gmra.mrb[0].mxu0 %v1489
        %v1544 = vpop.f32.mrb[0].mxu0
        %v1545 = vadd.f32 0.0, %v1544
        %v1546 = vpop.f32.mrb[0].mxu0
        %v1547 = vadd.f32 0.0, %v1546
        %v1548 = vpop.f32.mrb[0].mxu0
        %v1549 = vadd.f32 0.0, %v1548
        %v1550 = vpop.f32.mrb[0].mxu0
        %v1551 = vadd.f32 0.0, %v1550
        %1552 = vdwg.mxu0
        %1553 = vmatprep.subr.bf16.mxu0 0
        %1554 = vmatpush1.bf16.msra.mxu0 %v1498
        %1555 = vmatprep.subr.bf16.mxu0 0
        %1556 = vmatpush1.bf16.msra.mxu0 0
        %1557 = vmatprep.subr.bf16.mxu0 0
        %1558 = vmatpush1.bf16.msra.mxu0 0
        %1559 = vmatprep.subr.bf16.mxu0 0
        %1560 = vmatpush1.bf16.msra.mxu0 0
        %1561 = vmatprep.subr.bf16.mxu0 0
        %1562 = vmatpush1.bf16.msra.mxu0 0
        %1563 = vmatprep.subr.bf16.mxu0 0
        %1564 = vmatpush1.bf16.msra.mxu0 0
        %1565 = vmatprep.subr.bf16.mxu0 0
        %1566 = vmatpush1.bf16.msra.mxu0 0
        %1567 = vmatprep.subr.bf16.mxu0 0
        %1568 = vmatpush1.bf16.msra.mxu0 0
        %1569 = vmatprep.subr.bf16.mxu0 0
        %1570 = vmatpush1.bf16.msra.mxu0 0
        %1571 = vmatprep.subr.bf16.mxu0 0
        %1572 = vmatpush1.bf16.msra.mxu0 0
        %1573 = vmatprep.subr.bf16.mxu0 0
        %1574 = vmatpush1.bf16.msra.mxu0 0
        %1575 = vmatprep.subr.bf16.mxu0 0
        %1576 = vmatpush1.bf16.msra.mxu0 0
        %1577 = vmatprep.subr.bf16.mxu0 0
        %1578 = vmatpush1.bf16.msra.mxu0 0
        %1579 = vmatprep.subr.bf16.mxu0 0
        %1580 = vmatpush1.bf16.msra.mxu0 0
        %1581 = vmatprep.subr.bf16.mxu0 0
        %1582 = vmatpush1.bf16.msra.mxu0 0
        %1583 = vmatprep.subr.bf16.mxu0 0
        %1584 = vmatpush1.bf16.msra.mxu0 0
        %1585 = vmatprep.mubr.bf16.mxu0 0
        %1586 = vmatmul.mubr.bf16.gmra.mrb[0].mxu0 %v1486
        %v1587 = vpop.f32.mrb[0].mxu0
        %v1588 = vadd.f32 0.0, %v1587
        %v1589 = vpop.f32.mrb[0].mxu0
        %v1590 = vpop.f32.mrb[0].mxu0
        %v1591 = vadd.f32 0.0, %v1590
        %v1592 = vpop.f32.mrb[0].mxu0
        %1593 = vmatprep.mubr.bf16.mxu0 0
        %1594 = vmatmul.mubr.bf16.gmra.mrb[0].mxu0 %v1489
        %v1595 = vpop.f32.mrb[0].mxu0
        %v1596 = vadd.f32 0.0, %v1595
        %v1597 = vpop.f32.mrb[0].mxu0
        %v1598 = vpop.f32.mrb[0].mxu0
        %v1599 = vadd.f32 0.0, %v1598
        %v1600 = vpop.f32.mrb[0].mxu0
        %1601 = vdwg.mxu0
        %v1602 = vadd.f32 %v1427, %v1535
        %v1603 = vadd.f32 %v1428, %v1537
        %v1604 = vadd.f32 %v1429, %v1588
        %v1605 = vadd.f32 %v1430, %v1539
        %v1606 = vadd.f32 %v1431, %v1541
        %v1607 = vadd.f32 %v1432, %v1591
        %v1608 = vadd.f32 %v1433, %v1545
        %v1609 = vadd.f32 %v1434, %v1547
        %v1610 = vadd.f32 %v1435, %v1596
        %v1611 = vadd.f32 %v1436, %v1549
        %v1612 = vadd.f32 %v1437, %v1551
        %v1613 = vadd.f32 %v1438, %v1599
        %v1614 = vld [vmem:[%s222] sm:$0xff]
        %s1615 = scalar_lea.vmem %s1, 128
        %v1616 = vld [vmem:[%s1615] sm:$0xf]
        %v1617 = vld [vmem:[%s1615 + $0x4] sm:$0xf]
        %v1618 = vld [vmem:[%s1615 + $0x8] sm:$0xf]
        %v1619 = vld [vmem:[%s1615 + $0xc] sm:$0xf]
        %v1624 = vunpack.c.l.b16 %v1616
        %v1625 = vunpack.c.l.b16 %v1617
        %v1626 = vunpack.c.l.b16 %v1618
        %v1627 = vunpack.c.l.b16 %v1619
        %v1628 = vpack.c.b16 %v1625, %v1624
        %v1629 = vpack.c.b16 %v1627, %v1626
        %v1631 = vcombine.high %v1614, %v1614
        %v1633 = vunpack.c.l.s4 1983009808
        %v1634 = vunpack.c.0.s8 %v1633
        %v1635 = vlaneseq
        %v1636 = vshrl.u32 %v1635, 7
        %v1637 = vsub.s32 %v1634, %v1636
        %v1638 = vrot.slane %v1614, %v1637
        %v1640 = vunpack.c.l.s4 1983009808
        %v1641 = vunpack.c.0.s8 %v1640
        %v1642 = vlaneseq
        %v1643 = vshrl.u32 %v1642, 7
        %v1644 = vsub.s32 %v1641, %v1643
        %v1645 = vrot.slane %v1631, %v1644
        %v1646 = vcombine.high %v1638, %v1638
        %v1647 = vcombine.high %v1645, %v1645
        %1648 = vrot.lane.b32.xlu0 %v1638, 90
        %v1649 = vpop.permute.xlu0 %1648
        %1650 = vrot.lane.b32.xlu0 %v1646, 90
        %v1651 = vpop.permute.xlu0 %1650
        %1652 = vrot.lane.b32.xlu0 %v1645, 90
        %v1653 = vpop.permute.xlu0 %1652
        %1654 = vrot.lane.b32.xlu0 %v1647, 90
        %v1655 = vpop.permute.xlu0 %1654
        %vm1656 = vcmask 736256
        %v1657 = vsel %vm1656, %v1649, %v1651
        %v1658 = vsel %vm1656, %v1651, %v1653
        %v1659 = vsel %vm1656, %v1653, %v1655
        %v1661 = vsel %vm301, %v1628, 0
        %v1664 = vsel %vm301, %v1629, 0
        %v1667 = vsel %vm308, %v1657, 0
        %v1670 = vsel %vm308, %v1658, 0
        %v1673 = vsel %vm308, %v1659, 0
        %1675 = vmatprep.subr.bf16.mxu0 %v1670
        %1676 = vmatpush1.bf16.msra.mxu0 %v1667
        %1677 = vmatprep.subr.bf16.mxu0 0
        %1678 = vmatpush1.bf16.msra.mxu0 0
        %1679 = vmatprep.subr.bf16.mxu0 0
        %1680 = vmatpush1.bf16.msra.mxu0 0
        %1681 = vmatprep.subr.bf16.mxu0 0
        %1682 = vmatpush1.bf16.msra.mxu0 0
        %1683 = vmatprep.subr.bf16.mxu0 0
        %1684 = vmatpush1.bf16.msra.mxu0 0
        %1685 = vmatprep.subr.bf16.mxu0 0
        %1686 = vmatpush1.bf16.msra.mxu0 0
        %1687 = vmatprep.subr.bf16.mxu0 0
        %1688 = vmatpush1.bf16.msra.mxu0 0
        %1689 = vmatprep.subr.bf16.mxu0 0
        %1690 = vmatpush1.bf16.msra.mxu0 0
        %1691 = vmatprep.subr.bf16.mxu0 0
        %1692 = vmatpush1.bf16.msra.mxu0 0
        %1693 = vmatprep.subr.bf16.mxu0 0
        %1694 = vmatpush1.bf16.msra.mxu0 0
        %1695 = vmatprep.subr.bf16.mxu0 0
        %1696 = vmatpush1.bf16.msra.mxu0 0
        %1697 = vmatprep.subr.bf16.mxu0 0
        %1698 = vmatpush1.bf16.msra.mxu0 0
        %1699 = vmatprep.subr.bf16.mxu0 0
        %1700 = vmatpush1.bf16.msra.mxu0 0
        %1701 = vmatprep.subr.bf16.mxu0 0
        %1702 = vmatpush1.bf16.msra.mxu0 0
        %1703 = vmatprep.subr.bf16.mxu0 0
        %1704 = vmatpush1.bf16.msra.mxu0 0
        %1705 = vmatprep.subr.bf16.mxu0 0
        %1706 = vmatpush1.bf16.msra.mxu0 0
        %1707 = vmatprep.mubr.bf16.mxu0 0
        %1708 = vmatmul.mubr.bf16.gmra.mrb[0].mxu0 %v1661
        %v1709 = vpop.f32.mrb[0].mxu0
        %v1710 = vadd.f32 0.0, %v1709
        %v1711 = vpop.f32.mrb[0].mxu0
        %v1712 = vadd.f32 0.0, %v1711
        %v1713 = vpop.f32.mrb[0].mxu0
        %v1714 = vadd.f32 0.0, %v1713
        %v1715 = vpop.f32.mrb[0].mxu0
        %v1716 = vadd.f32 0.0, %v1715
        %1717 = vmatprep.mubr.bf16.mxu0 0
        %1718 = vmatmul.mubr.bf16.gmra.mrb[0].mxu0 %v1664
        %v1719 = vpop.f32.mrb[0].mxu0
        %v1720 = vadd.f32 0.0, %v1719
        %v1721 = vpop.f32.mrb[0].mxu0
        %v1722 = vadd.f32 0.0, %v1721
        %v1723 = vpop.f32.mrb[0].mxu0
        %v1724 = vadd.f32 0.0, %v1723
        %v1725 = vpop.f32.mrb[0].mxu0
        %v1726 = vadd.f32 0.0, %v1725
        %1727 = vdwg.mxu0
        %1728 = vmatprep.subr.bf16.mxu0 0
        %1729 = vmatpush1.bf16.msra.mxu0 %v1673
        %1730 = vmatprep.subr.bf16.mxu0 0
        %1731 = vmatpush1.bf16.msra.mxu0 0
        %1732 = vmatprep.subr.bf16.mxu0 0
        %1733 = vmatpush1.bf16.msra.mxu0 0
        %1734 = vmatprep.subr.bf16.mxu0 0
        %1735 = vmatpush1.bf16.msra.mxu0 0
        %1736 = vmatprep.subr.bf16.mxu0 0
        %1737 = vmatpush1.bf16.msra.mxu0 0
        %1738 = vmatprep.subr.bf16.mxu0 0
        %1739 = vmatpush1.bf16.msra.mxu0 0
        %1740 = vmatprep.subr.bf16.mxu0 0
        %1741 = vmatpush1.bf16.msra.mxu0 0
        %1742 = vmatprep.subr.bf16.mxu0 0
        %1743 = vmatpush1.bf16.msra.mxu0 0
        %1744 = vmatprep.subr.bf16.mxu0 0
        %1745 = vmatpush1.bf16.msra.mxu0 0
        %1746 = vmatprep.subr.bf16.mxu0 0
        %1747 = vmatpush1.bf16.msra.mxu0 0
        %1748 = vmatprep.subr.bf16.mxu0 0
        %1749 = vmatpush1.bf16.msra.mxu0 0
        %1750 = vmatprep.subr.bf16.mxu0 0
        %1751 = vmatpush1.bf16.msra.mxu0 0
        %1752 = vmatprep.subr.bf16.mxu0 0
        %1753 = vmatpush1.bf16.msra.mxu0 0
        %1754 = vmatprep.subr.bf16.mxu0 0
        %1755 = vmatpush1.bf16.msra.mxu0 0
        %1756 = vmatprep.subr.bf16.mxu0 0
        %1757 = vmatpush1.bf16.msra.mxu0 0
        %1758 = vmatprep.subr.bf16.mxu0 0
        %1759 = vmatpush1.bf16.msra.mxu0 0
        %1760 = vmatprep.mubr.bf16.mxu0 0
        %1761 = vmatmul.mubr.bf16.gmra.mrb[0].mxu0 %v1661
        %v1762 = vpop.f32.mrb[0].mxu0
        %v1763 = vadd.f32 0.0, %v1762
        %v1764 = vpop.f32.mrb[0].mxu0
        %v1765 = vpop.f32.mrb[0].mxu0
        %v1766 = vadd.f32 0.0, %v1765
        %v1767 = vpop.f32.mrb[0].mxu0
        %1768 = vmatprep.mubr.bf16.mxu0 0
        %1769 = vmatmul.mubr.bf16.gmra.mrb[0].mxu0 %v1664
        %v1770 = vpop.f32.mrb[0].mxu0
        %v1771 = vadd.f32 0.0, %v1770
        %v1772 = vpop.f32.mrb[0].mxu0
        %v1773 = vpop.f32.mrb[0].mxu0
        %v1774 = vadd.f32 0.0, %v1773
        %v1775 = vpop.f32.mrb[0].mxu0
        %1776 = vdwg.mxu0
        %v1777 = vadd.f32 %v1602, %v1710
        %v1778 = vadd.f32 %v1603, %v1712
        %v1779 = vadd.f32 %v1604, %v1763
        %v1780 = vadd.f32 %v1605, %v1714
        %v1781 = vadd.f32 %v1606, %v1716
        %v1782 = vadd.f32 %v1607, %v1766
        %v1783 = vadd.f32 %v1608, %v1720
        %v1784 = vadd.f32 %v1609, %v1722
        %v1785 = vadd.f32 %v1610, %v1771
        %v1786 = vadd.f32 %v1611, %v1724
        %v1787 = vadd.f32 %v1612, %v1726
        %v1788 = vadd.f32 %v1613, %v1774
        %v1790 = vlaneseq
        %v1791 = vshrl.u32 %v1790, 7
        %v1792 = vsub.s32 0, %v1791
        %v1793 = vrot.slane %v224, %v1792
        %v1794 = vlaneseq
        %v1795 = vshrl.u32 %v1794, 7
        %v1796 = vsub.s32 1, %v1795
        %v1797 = vrot.slane %v224, %v1796
        %v1798 = vlaneseq
        %v1799 = vshrl.u32 %v1798, 7
        %v1800 = vsub.s32 2, %v1799
        %v1801 = vrot.slane %v224, %v1800
        %v1805 = vmul.f32 %v1777, %v1793
        %v1806 = vmul.f32 %v1778, %v1797
        %v1807 = vmul.f32 %v1779, %v1801
        %v1808 = vmul.f32 %v1780, %v1793
        %v1809 = vmul.f32 %v1781, %v1797
        %v1810 = vmul.f32 %v1782, %v1801
        %v1811 = vmul.f32 %v1783, %v1793
        %v1812 = vmul.f32 %v1784, %v1797
        %v1813 = vmul.f32 %v1785, %v1801
        %v1814 = vmul.f32 %v1786, %v1793
        %v1815 = vmul.f32 %v1787, %v1797
        %v1816 = vmul.f32 %v1788, %v1801
        %v1817 = vadd.f32 %v1805, %v1806
        %v1818 = vadd.f32 %v1817, %v1807
        %1819 = vadd.xlane.f32.xlu0 %v1818
        %v1820 = vpop.xlane.xlu0 %1819
        %v1821 = vadd.f32 %v1808, %v1809
        %v1822 = vadd.f32 %v1821, %v1810
        %1823 = vadd.xlane.f32.xlu0 %v1822
        %v1824 = vpop.xlane.xlu0 %1823
        %v1825 = vadd.f32 %v1811, %v1812
        %v1826 = vadd.f32 %v1825, %v1813
        %1827 = vadd.xlane.f32.xlu0 %v1826
        %v1828 = vpop.xlane.xlu0 %1827
        %v1829 = vadd.f32 %v1814, %v1815
        %v1830 = vadd.f32 %v1829, %v1816
        %1831 = vadd.xlane.f32.xlu0 %v1830
        %v1832 = vpop.xlane.xlu0 %1831
        %v1833 = vmul.f32 %v1805, %v1777
        %v1834 = vmul.f32 %v1806, %v1778
        %v1835 = vmul.f32 %v1807, %v1779
        %v1836 = vmul.f32 %v1808, %v1780
        %v1837 = vmul.f32 %v1809, %v1781
        %v1838 = vmul.f32 %v1810, %v1782
        %v1839 = vmul.f32 %v1811, %v1783
        %v1840 = vmul.f32 %v1812, %v1784
        %v1841 = vmul.f32 %v1813, %v1785
        %v1842 = vmul.f32 %v1814, %v1786
        %v1843 = vmul.f32 %v1815, %v1787
        %v1844 = vmul.f32 %v1816, %v1788
        %v1845 = vadd.f32 %v1833, %v1834
        %v1846 = vadd.f32 %v1845, %v1835
        %1847 = vadd.xlane.f32.xlu0 %v1846
        %v1848 = vpop.xlane.xlu0 %1847
        %v1849 = vadd.f32 %v1836, %v1837
        %v1850 = vadd.f32 %v1849, %v1838
        %1851 = vadd.xlane.f32.xlu0 %v1850
        %v1852 = vpop.xlane.xlu0 %1851
        %v1853 = vadd.f32 %v1839, %v1840
        %v1854 = vadd.f32 %v1853, %v1841
        %1855 = vadd.xlane.f32.xlu0 %v1854
        %v1856 = vpop.xlane.xlu0 %1855
        %v1857 = vadd.f32 %v1842, %v1843
        %v1858 = vadd.f32 %v1857, %v1844
        %1859 = vadd.xlane.f32.xlu0 %v1858
        %v1860 = vpop.xlane.xlu0 %1859
        %v1861 = vmul.f32 %v1820, %v246
        %v1862 = vmul.f32 %v1824, %v247
        %v1863 = vmul.f32 %v1828, %v248
        %v1864 = vmul.f32 %v1832, %v249
        %vm1865 = vcmask 64512
        %v1866 = vsel %vm1865, %v1861, 0.0
        %v1867 = vsel %vm1865, %v1862, 0.0
        %v1868 = vadd.f32 %v1866, %v1867
        %v1869 = vsel %vm1865, %v1863, 0.0
        %v1870 = vadd.f32 %v1868, %v1869
        %v1871 = vsel %vm1865, %v1864, 0.0
        %v1872 = vadd.f32 %v1870, %v1871
        %v1873 = vrot.slane %v1872, 4
        %v1874 = vadd.f32 %v1872, %v1873
        %v1875 = vrot.slane %v1874, 2
        %v1876 = vadd.f32 %v1874, %v1875
        %v1877 = vrot.slane %v1876, 1
        %v1878 = vadd.f32 %v1876, %v1877
        %v1879 = vmul.f32 %v1848, %v246
        %v1880 = vmul.f32 %v1852, %v247
        %v1881 = vmul.f32 %v1856, %v248
        %v1882 = vmul.f32 %v1860, %v249
        %v1883 = vsel %vm1865, %v1879, 0.0
        %v1884 = vsel %vm1865, %v1880, 0.0
        %v1885 = vadd.f32 %v1883, %v1884
        %v1886 = vsel %vm1865, %v1881, 0.0
        %v1887 = vadd.f32 %v1885, %v1886
        %v1888 = vsel %vm1865, %v1882, 0.0
        %v1889 = vadd.f32 %v1887, %v1888
        %v1890 = vrot.slane %v1889, 4
        %v1891 = vadd.f32 %v1889, %v1890
        %v1892 = vrot.slane %v1891, 2
        %v1893 = vadd.f32 %v1891, %v1892
        %v1894 = vrot.slane %v1893, 1
        %v1895 = vadd.f32 %v1893, %v1894
        %v1896 = vmul.f32 %v1878, 0.0009765625
        %v1897 = vmul.f32 %v1895, 0.0009765625
        %v1898 = vmul.f32 %v1896, %v1896
        %v1899 = vsub.f32 %v1897, %v1898
        %v1900 = vmax.f32 %v1899, 0.0
        %v1901 = vadd.f32 %v1900, 1e-05
        %v1902 = vrsqrt.pop %v1901
        %v1903 = vmul.f32 %v1896, %v246
        %v1904 = vmul.f32 %v1896, %v247
        %v1905 = vmul.f32 %v1896, %v248
        %v1906 = vmul.f32 %v1896, %v249
        %v1907 = vsel %vm1865, %v1903, 0.0
        %1908 = vadd.xlane.f32.xlu0 %v1907
        %v1909 = vpop.xlane.xlu0 %1908
        %v1910 = vsel %vm1865, %v1904, 0.0
        %1911 = vadd.xlane.f32.xlu0 %v1910
        %v1912 = vpop.xlane.xlu0 %1911
        %v1913 = vsel %vm1865, %v1905, 0.0
        %1914 = vadd.xlane.f32.xlu0 %v1913
        %v1915 = vpop.xlane.xlu0 %1914
        %v1916 = vsel %vm1865, %v1906, 0.0
        %1917 = vadd.xlane.f32.xlu0 %v1916
        %v1918 = vpop.xlane.xlu0 %1917
        %v1919 = vmul.f32 %v1902, %v246
        %v1920 = vmul.f32 %v1902, %v247
        %v1921 = vmul.f32 %v1902, %v248
        %v1922 = vmul.f32 %v1902, %v249
        %v1923 = vsel %vm1865, %v1919, 0.0
        %1924 = vadd.xlane.f32.xlu0 %v1923
        %v1925 = vpop.xlane.xlu0 %1924
        %v1926 = vsel %vm1865, %v1920, 0.0
        %1927 = vadd.xlane.f32.xlu0 %v1926
        %v1928 = vpop.xlane.xlu0 %1927
        %v1929 = vsel %vm1865, %v1921, 0.0
        %1930 = vadd.xlane.f32.xlu0 %v1929
        %v1931 = vpop.xlane.xlu0 %1930
        %v1932 = vsel %vm1865, %v1922, 0.0
        %1933 = vadd.xlane.f32.xlu0 %v1932
        %v1934 = vpop.xlane.xlu0 %1933
        %v1935 = vld [vmem:[%s2] sm:$0xff]
        %v1936 = vld [vmem:[%s2 + $0x8] sm:$0xff]
        %v1937 = vld [vmem:[%s2 + $0x10] sm:$0xff]
        %v1938 = vld [vmem:[%s2 + $0x18] sm:$0xff]
        %v1939 = vmul.f32 %v1925, %v1935
        %v1940 = vmul.f32 %v1928, %v1936
        %v1941 = vmul.f32 %v1931, %v1937
        %v1942 = vmul.f32 %v1934, %v1938
        %v1943 = vld [vmem:[%s3] sm:$0xff]
        %v1944 = vld [vmem:[%s3 + $0x8] sm:$0xff]
        %v1945 = vld [vmem:[%s3 + $0x10] sm:$0xff]
        %v1946 = vld [vmem:[%s3 + $0x18] sm:$0xff]
        %v1947 = vmul.f32 %v1909, %v1939
        %v1948 = vmul.f32 %v1912, %v1940
        %v1949 = vmul.f32 %v1915, %v1941
        %v1950 = vmul.f32 %v1918, %v1942
        %v1951 = vsub.f32 %v1943, %v1947
        %v1952 = vsub.f32 %v1944, %v1948
        %v1953 = vsub.f32 %v1945, %v1949
        %v1954 = vsub.f32 %v1946, %v1950
        %1956 = vset.pattern.permute.xlu0 0
        %1957 = vperm.xlu0 %1956, %v1939
        %v1958 = vpop.permute.xlu0 %1957
        %1961 = vset.pattern.permute.xlu0 0
        %1962 = vperm.xlu0 %1961, %v1940
        %v1963 = vpop.permute.xlu0 %1962
        %1966 = vset.pattern.permute.xlu0 0
        %1967 = vperm.xlu0 %1966, %v1941
        %v1968 = vpop.permute.xlu0 %1967
        %1971 = vset.pattern.permute.xlu0 0
        %1972 = vperm.xlu0 %1971, %v1942
        %v1973 = vpop.permute.xlu0 %1972
        %v1975 = vmul.f32 %v1777, %v1958
        %v1976 = vmul.f32 %v1778, %v1958
        %v1977 = vmul.f32 %v1779, %v1958
        %v1978 = vmul.f32 %v1780, %v1963
        %v1979 = vmul.f32 %v1781, %v1963
        %v1980 = vmul.f32 %v1782, %v1963
        %v1981 = vmul.f32 %v1783, %v1968
        %v1982 = vmul.f32 %v1784, %v1968
        %v1983 = vmul.f32 %v1785, %v1968
        %v1984 = vmul.f32 %v1786, %v1973
        %v1985 = vmul.f32 %v1787, %v1973
        %v1986 = vmul.f32 %v1788, %v1973
        %1988 = vset.pattern.permute.xlu0 0
        %1989 = vperm.xlu0 %1988, %v1951
        %v1990 = vpop.permute.xlu0 %1989
        %1993 = vset.pattern.permute.xlu0 0
        %1994 = vperm.xlu0 %1993, %v1952
        %v1995 = vpop.permute.xlu0 %1994
        %1998 = vset.pattern.permute.xlu0 0
        %1999 = vperm.xlu0 %1998, %v1953
        %v2000 = vpop.permute.xlu0 %1999
        %2003 = vset.pattern.permute.xlu0 0
        %2004 = vperm.xlu0 %2003, %v1954
        %v2005 = vpop.permute.xlu0 %2004
        %v2007 = vadd.f32 %v1975, %v1990
        %v2008 = vadd.f32 %v1976, %v1990
        %v2009 = vadd.f32 %v1977, %v1990
        %v2010 = vadd.f32 %v1978, %v1995
        %v2011 = vadd.f32 %v1979, %v1995
        %v2012 = vadd.f32 %v1980, %v1995
        %v2013 = vadd.f32 %v1981, %v2000
        %v2014 = vadd.f32 %v1982, %v2000
        %v2015 = vadd.f32 %v1983, %v2000
        %v2016 = vadd.f32 %v1984, %v2005
        %v2017 = vadd.f32 %v1985, %v2005
        %v2018 = vadd.f32 %v1986, %v2005
        %v2019 = vmax.f32 %v2007, 0.0
        %v2020 = vmax.f32 %v2008, 0.0
        %v2021 = vmax.f32 %v2009, 0.0
        %v2022 = vmax.f32 %v2010, 0.0
        %v2023 = vmax.f32 %v2011, 0.0
        %v2024 = vmax.f32 %v2012, 0.0
        %v2025 = vmax.f32 %v2013, 0.0
        %v2026 = vmax.f32 %v2014, 0.0
        %v2027 = vmax.f32 %v2015, 0.0
        %v2028 = vmax.f32 %v2016, 0.0
        %v2029 = vmax.f32 %v2017, 0.0
        %v2030 = vmax.f32 %v2018, 0.0
        %2031 = vst [vmem:[%s217] sm:$0xff] %v2019
        %2032 = vst [vmem:[%s217 + $0x8] sm:$0xff] %v2020
        %2033 = vst [vmem:[%s217 + $0x10] sm:$0xff] %v2021
        %2034 = vst [vmem:[%s217 + $0x18] sm:$0xff] %v2022
        %2035 = vst [vmem:[%s217 + $0x20] sm:$0xff] %v2023
        %2036 = vst [vmem:[%s217 + $0x28] sm:$0xff] %v2024
        %2037 = vst [vmem:[%s217 + $0x30] sm:$0xff] %v2025
        %2038 = vst [vmem:[%s217 + $0x38] sm:$0xff] %v2026
        %2039 = vst [vmem:[%s217 + $0x40] sm:$0xff] %v2027
        %2040 = vst [vmem:[%s217 + $0x48] sm:$0xff] %v2028
        %2041 = vst [vmem:[%s217 + $0x50] sm:$0xff] %v2029
        %2042 = vst [vmem:[%s217 + $0x58] sm:$0xff] %v2030
        %s2043 = sand.u32 %s137, 1
        %s2044 = scalar_lea.sflag [#allocation3], %s2043
        %s2045 = sand.u32 %s137, 1
        %s2046 = smul.addr %s2045, 96
        %s2047 = scalar_lea.vmem [#allocation2], %s2046
        // Predicated region
        $region41: #{tpu_custom_call.1} parent=39 // pred_check
          %p2048 = pneg %p147
        $region42: #{tpu_custom_call.1} parent=39 // pred_check_branch
          %2050 = sbr.rel (%p2048) target = $region44
        $region43: #{tpu_custom_call.1} parent=39 // pred_region
          %s2052 = ssub.s32 1536, 1536
          %2053 = vsyncadd %s2044, %s2052
          %s2054 = smul.addr %s19, 12
          %s2055 = smul.addr %s2054, 128
          %s2056 = scalar_lea.hbm %s5, %s2055
          %s2057 = sshll.u32 %s2047, 4
          %s2058 = int_to_ptr.vmem [resolvable:$true] %s2057
          %2063 = dma.vmem_to_hbm [thread:$0]  %s2058, 1536, %s2056, %s2044, 384, 384, 24
        $region44: #{tpu_custom_call.1} parent=39 // pred_fallthru
          _
      $region40: #{tpu_custom_call.1} parent=5 // pred_fallthru
        _
      %p2064 = scmp.le.s32.totalorder 2, %s14
      // Predicated region
      $region45: #{tpu_custom_call.1} parent=5 // pred_check
        %p2065 = pneg %p2064
      $region46: #{tpu_custom_call.1} parent=5 // pred_check_branch
        %2067 = sbr.rel (%p2065) target = $region48
      $region47: #{tpu_custom_call.1} parent=5 // pred_region
        %s2068 = ssub.s32 %s14, 2
        // Predicated region
        $region49: #{tpu_custom_call.1} parent=47 // pred_check
          %p2069 = pneg %p153
        $region50: #{tpu_custom_call.1} parent=47 // pred_check_branch
          %2071 = sbr.rel (%p2069) target = $region52
        $region51: #{tpu_custom_call.1} parent=47 // pred_region
          %s2072 = sand.u32 %s138, 1
          %s2073 = scalar_lea.sflag [#allocation3], %s2072
          %s2074 = sand.u32 %s138, 1
          %s2075 = smul.addr %s2074, 96
          %s2076 = scalar_lea.vmem [#allocation2], %s2075
          %2077 = dma.done %s2073, 1536
        $region52: #{tpu_custom_call.1} parent=47 // pred_fallthru
          _
      $region48: #{tpu_custom_call.1} parent=5 // pred_fallthru
        _
    $region6: #{tpu_custom_call.1} parent=1 // loop_footer
      %s18 = sadd.s32 1, %s14
    $region7: #{tpu_custom_call.1} parent=1 // loop_footer_branch
      %13 = sbr.rel target = $region3
    $region8: #{tpu_custom_call.1} parent=1 // loop_exit
      _
    %2078 = vsyncpa [#allocation3], 1
    %s2079 = scalar_lea.sflag [#allocation3], 1
    %2080 = vsyncpa %s2079, 1

</llo_original>
